<compile_context>
chip_gen: v7x
topology: tpu7x:2x2x1
jax: 0.10.0
libtpu: 0.0.40
codegen_flags: <defaults>
</compile_context>

<pallas_src>
import functools

import jax
import jax.numpy as jnp
from jax.experimental import pallas as pl
from jax.experimental.pallas import tpu as pltpu


def _round_up(x, m):
    return (x + m - 1) // m * m


def _pad_to(x, shape):
    pads = [(0, t - s) for s, t in zip(x.shape, shape)]
    return jnp.pad(x, pads)


def _gcn_fused_kernel(x_ref, adj_ref, w1_ref, b1_ref, w2_ref, b2_ref,
                      w3_ref, b3_ref, out_ref, *, adj_first):
    # x_ref:   (Bt, Np, D1p) bf16     adj_ref: (Bt, Np, Np) bf16
    # w*_ref:  (Din_p, Dout_p) bf16   b*_ref:  (1, Dout_p) f32
    # out_ref: (Bt, Np, Dop) bf16
    Bt, Np, _ = adj_ref.shape
    adj = adj_ref[...]                       # resident in VMEM for all 3 layers

    def layer(h2d_bf, w_ref, b_ref, relu, adj_lhs_first):
        # h2d_bf: (Bt*Np, Din_p) bf16 — batch folded into the matmul M dim so
        # the W matmul fills the MXU even when each graph is small.
        w = w_ref[...]
        if adj_lhs_first:
            # (adj @ h) @ W — cheaper when Din < Dout.
            t = jnp.einsum("bnm,bmd->bnd", adj, h2d_bf.reshape(Bt, Np, -1),
                           preferred_element_type=jnp.float32)
            y = jnp.dot(t.astype(jnp.bfloat16).reshape(Bt * Np, -1), w,
                        preferred_element_type=jnp.float32)
        else:
            # adj @ (h @ W) — cheaper when Din >= Dout.
            t = jnp.dot(h2d_bf, w, preferred_element_type=jnp.float32)
            y = jnp.einsum("bnm,bmd->bnd", adj,
                           t.astype(jnp.bfloat16).reshape(Bt, Np, -1),
                           preferred_element_type=jnp.float32)
            y = y.reshape(Bt * Np, -1)
        y = y + b_ref[...]                   # (1, Dout) broadcast, f32
        if relu:
            y = jnp.maximum(y, 0.0)
        return y.astype(jnp.bfloat16)        # keep inter-layer values bf16

    h0 = x_ref[...].reshape(Bt * Np, -1)
    h1 = layer(h0, w1_ref, b1_ref, True, adj_first[0])
    h2 = layer(h1, w2_ref, b2_ref, True, adj_first[1])
    h3 = layer(h2, w3_ref, b3_ref, False, adj_first[2])
    out_ref[...] = h3.reshape(Bt, Np, -1)


def gcn_forward(batch_graph, adj, params):
    """Equivalent of GCN.forward (eval mode: dropout == identity).

    batch_graph: (B, N, input_dim) f32
    adj:         (B, N, N)         f32
    returns:     (B, N, output_dim) f32
    """
    B, N, Din = batch_graph.shape
    H = params["w1"].shape[1]
    Dout = params["w3"].shape[1]

    # Lane-dense padding: node dim (adj's lane / contraction dim) and all
    # feature dims to multiples of 128.
    Np = _round_up(N, 128)
    D1p = _round_up(Din, 128)
    Hp = _round_up(H, 128)
    Dop = _round_up(Dout, 128)

    # Graphs per grid step: target a folded M dim of >= 256.
    Bt = max(1, min(B, 256 // Np))
    Bp = _round_up(B, Bt)

    x_p = _pad_to(batch_graph, (Bp, Np, D1p)).astype(jnp.bfloat16)
    adj_p = _pad_to(adj, (Bp, Np, Np)).astype(jnp.bfloat16)
    w1_p = _pad_to(params["w1"], (D1p, Hp)).astype(jnp.bfloat16)
    w2_p = _pad_to(params["w2"], (Hp, Hp)).astype(jnp.bfloat16)
    w3_p = _pad_to(params["w3"], (Hp, Dop)).astype(jnp.bfloat16)
    b1_p = _pad_to(params["b1"], (Hp,)).reshape(1, Hp).astype(jnp.float32)
    b2_p = _pad_to(params["b2"], (Hp,)).reshape(1, Hp).astype(jnp.float32)
    b3_p = _pad_to(params["b3"], (Dop,)).reshape(1, Dop).astype(jnp.float32)

    # Static per-layer association-order choice (on padded MXU dims).
    adj_first = (D1p < Hp, False, Hp < Dop)

    kernel = functools.partial(_gcn_fused_kernel, adj_first=adj_first)

    # VMEM budget: double-buffered streaming blocks + single-buffered weights
    # + in-kernel intermediates, with headroom; capped at 64 MiB (v7x TC).
    adj_blk = Bt * Np * Np * 2
    x_blk = Bt * Np * D1p * 2
    out_blk = Bt * Np * Dop * 2
    w_bytes = (D1p * Hp + Hp * Hp + Hp * Dop) * 2 + (2 * Hp + Dop) * 4
    interm = Bt * Np * max(Hp, Dop) * 6 * 2
    vmem_need = 2 * (adj_blk + x_blk + out_blk) + w_bytes + interm
    vmem_limit = min(max(int(vmem_need * 1.5) + (2 << 20), 16 << 20), 64 << 20)

    def const_spec(shape):
        nd = len(shape)
        # Constant index_map -> fetched once; single buffer saves VMEM.
        return pl.BlockSpec(shape, lambda bb: (0,) * nd,
                            pipeline_mode=pl.Buffered(1))

    out_p = pl.pallas_call(
        kernel,
        out_shape=jax.ShapeDtypeStruct((Bp, Np, Dop), jnp.bfloat16),
        grid_spec=pltpu.PrefetchScalarGridSpec(
            num_scalar_prefetch=0,
            grid=(Bp // Bt,),
            in_specs=[
                pl.BlockSpec((Bt, Np, D1p), lambda bb: (bb, 0, 0)),
                pl.BlockSpec((Bt, Np, Np), lambda bb: (bb, 0, 0)),
                const_spec((D1p, Hp)),
                const_spec((1, Hp)),
                const_spec((Hp, Hp)),
                const_spec((1, Hp)),
                const_spec((Hp, Dop)),
                const_spec((1, Dop)),
            ],
            out_specs=pl.BlockSpec((Bt, Np, Dop), lambda bb: (bb, 0, 0)),
        ),
        compiler_params=pltpu.CompilerParams(
            dimension_semantics=("parallel",),
            vmem_limit_bytes=vmem_limit),
    )(x_p, adj_p, w1_p, b1_p, w2_p, b2_p, w3_p, b3_p)

    # Slice off padding; upcast to f32 to match the reference module's dtype.
    return out_p[:B, :N, :Dout].astype(jnp.float32)


def xavier_uniform(key, shape):
    fan_in, fan_out = shape
    limit = jnp.sqrt(6.0 / (fan_in + fan_out))
    return jax.random.uniform(key, shape, jnp.float32, -limit, limit)


def init_gcn_params(input_dim, output_dim, hidden_dim, seed=0):
    k = jax.random.PRNGKey(seed)
    k1, k2, k3 = jax.random.split(k, 3)
    return {
        "w1": xavier_uniform(k1, (input_dim, hidden_dim)),
        "b1": jnp.zeros((hidden_dim,), jnp.float32),
        "w2": xavier_uniform(k2, (hidden_dim, hidden_dim)),
        "b2": jnp.zeros((hidden_dim,), jnp.float32),
        "w3": xavier_uniform(k3, (hidden_dim, output_dim)),
        "b3": jnp.zeros((output_dim,), jnp.float32),
    }


def gcn_forward_ref(batch_graph, adj, params):
    """Pure-JAX f32 reference for correctness checking."""
    def layer(x, a, w, b, relu):
        y = jnp.einsum("bnm,bmd->bnd", a, x @ w) + b
        return jnp.maximum(y, 0.0) if relu else y
    x = layer(batch_graph, adj, params["w1"], params["b1"], True)
    x = layer(x, adj, params["w2"], params["b2"], True)
    return layer(x, adj, params["w3"], params["b3"], False)


if __name__ == "__main__":
    B, N = 4, 8
    input_dim, hidden_dim, output_dim = 16, 32, 8

    key = jax.random.PRNGKey(0)
    kx, ka = jax.random.split(key)
    batch_graph = jax.random.normal(kx, (B, N, input_dim), jnp.float32)
    # symmetric, row-normalized adjacency with self loops
    raw = jax.random.uniform(ka, (B, N, N), jnp.float32)
    adj = (raw + jnp.swapaxes(raw, 1, 2)) * 0.5 + jnp.eye(N)[None]
    adj = adj / jnp.sum(adj, axis=-1, keepdims=True)

    params = init_gcn_params(input_dim, output_dim, hidden_dim, seed=0)

    out = gcn_forward(batch_graph, adj, params)
    out = jax.block_until_ready(out)

    ref = gcn_forward_ref(batch_graph, adj, params)
    assert out.shape == (B, N, output_dim)
    # bf16 MXU inputs / bf16 output with f32 accumulation -> loose tolerance.
    assert jnp.allclose(out, ref, atol=3e-2, rtol=3e-2), (
        float(jnp.max(jnp.abs(out - ref))))

    print("KERNEL_OK")
</pallas_src>

<mosaic_0001>
module attributes {stable_mosaic.version = 11 : i64} {
  func.func @_gcn_fused_kernel(%arg0: i32, %arg1: memref<2x128x128xbf16, #tpu.memory_space<vmem>>, %arg2: memref<2x128x128xbf16, #tpu.memory_space<vmem>>, %arg3: memref<128x128xbf16, #tpu.memory_space<vmem>>, %arg4: memref<1x128xf32, #tpu.memory_space<vmem>>, %arg5: memref<128x128xbf16, #tpu.memory_space<vmem>>, %arg6: memref<1x128xf32, #tpu.memory_space<vmem>>, %arg7: memref<128x128xbf16, #tpu.memory_space<vmem>>, %arg8: memref<1x128xf32, #tpu.memory_space<vmem>>, %arg9: memref<2x128x128xbf16, #tpu.memory_space<vmem>>) attributes {dimension_semantics = [#tpu.dimension_semantics<parallel>], iteration_bounds = array<i64: 2>, scalar_prefetch = 0 : i64, scratch_operands = 0 : i64, tpu.core_type = #tpu.core_type<tc>, window_params = [{transform_indices = @transform_0, window_bounds = array<i64: 2, 128, 128>}, {transform_indices = @transform_1, window_bounds = array<i64: 2, 128, 128>}, {pipeline_mode = #tpu.pipeline_mode<synchronous>, transform_indices = @transform_2, window_bounds = array<i64: 128, 128>}, {pipeline_mode = #tpu.pipeline_mode<synchronous>, transform_indices = @transform_3, window_bounds = array<i64: 1, 128>}, {pipeline_mode = #tpu.pipeline_mode<synchronous>, transform_indices = @transform_4, window_bounds = array<i64: 128, 128>}, {pipeline_mode = #tpu.pipeline_mode<synchronous>, transform_indices = @transform_5, window_bounds = array<i64: 1, 128>}, {pipeline_mode = #tpu.pipeline_mode<synchronous>, transform_indices = @transform_6, window_bounds = array<i64: 128, 128>}, {pipeline_mode = #tpu.pipeline_mode<synchronous>, transform_indices = @transform_7, window_bounds = array<i64: 1, 128>}, {transform_indices = @transform_8, window_bounds = array<i64: 2, 128, 128>}]} {
    %c0 = arith.constant 0 : index
    %c0_0 = arith.constant 0 : index
    %c0_1 = arith.constant 0 : index
    %0 = vector.load %arg2[%c0, %c0_0, %c0_1] : memref<2x128x128xbf16, #tpu.memory_space<vmem>>, vector<2x128x128xbf16>
    %c0_2 = arith.constant 0 : index
    %c0_3 = arith.constant 0 : index
    %c0_4 = arith.constant 0 : index
    %1 = vector.load %arg1[%c0_2, %c0_3, %c0_4] : memref<2x128x128xbf16, #tpu.memory_space<vmem>>, vector<2x128x128xbf16>
    %2 = vector.shape_cast %1 : vector<2x128x128xbf16> to vector<256x128xbf16>
    %c0_5 = arith.constant 0 : index
    %c0_6 = arith.constant 0 : index
    %3 = vector.load %arg3[%c0_5, %c0_6] : memref<128x128xbf16, #tpu.memory_space<vmem>>, vector<128x128xbf16>
    %cst = arith.constant dense<0.000000e+00> : vector<256x128xf32>
    %4 = tpu.matmul %2, %3, %cst {dimension_numbers = #tpu.dot_dimension_numbers<[1], [0], [0], [1], [0, 0, 1, 1], [], []>} : vector<256x128xbf16>, vector<128x128xbf16>, vector<256x128xf32> -> vector<256x128xf32>
    %5 = arith.truncf %4 : vector<256x128xf32> to vector<256x128xbf16>
    %6 = vector.shape_cast %5 : vector<256x128xbf16> to vector<2x128x128xbf16>
    "tpu.trace_start"() <{level = 10 : i32, message = "bnm,bmd->bnd"}> : () -> ()
    %cst_7 = arith.constant dense<0.000000e+00> : vector<2x128x128xf32>
    %7 = tpu.matmul %0, %6, %cst_7 {dimension_numbers = #tpu.dot_dimension_numbers<[2], [1], [1], [2], [0, 0, 0, 1, 1, 2], [0], [0]>} : vector<2x128x128xbf16>, vector<2x128x128xbf16>, vector<2x128x128xf32> -> vector<2x128x128xf32>
    "tpu.trace_stop"() : () -> ()
    %8 = vector.shape_cast %7 : vector<2x128x128xf32> to vector<256x128xf32>
    %c0_8 = arith.constant 0 : index
    %c0_9 = arith.constant 0 : index
    %9 = vector.load %arg4[%c0_8, %c0_9] : memref<1x128xf32, #tpu.memory_space<vmem>>, vector<1x128xf32>
    %10 = vector.broadcast %9 : vector<1x128xf32> to vector<256x128xf32>
    %11 = arith.addf %8, %10 : vector<256x128xf32>
    %cst_10 = arith.constant 0.000000e+00 : f32
    %12 = vector.broadcast %cst_10 : f32 to vector<256x128xf32>
    %13 = arith.maximumf %11, %12 : vector<256x128xf32>
    %14 = arith.truncf %13 : vector<256x128xf32> to vector<256x128xbf16>
    %c0_11 = arith.constant 0 : index
    %c0_12 = arith.constant 0 : index
    %15 = vector.load %arg5[%c0_11, %c0_12] : memref<128x128xbf16, #tpu.memory_space<vmem>>, vector<128x128xbf16>
    %cst_13 = arith.constant dense<0.000000e+00> : vector<256x128xf32>
    %16 = tpu.matmul %14, %15, %cst_13 {dimension_numbers = #tpu.dot_dimension_numbers<[1], [0], [0], [1], [0, 0, 1, 1], [], []>} : vector<256x128xbf16>, vector<128x128xbf16>, vector<256x128xf32> -> vector<256x128xf32>
    %17 = arith.truncf %16 : vector<256x128xf32> to vector<256x128xbf16>
    %18 = vector.shape_cast %17 : vector<256x128xbf16> to vector<2x128x128xbf16>
    "tpu.trace_start"() <{level = 10 : i32, message = "bnm,bmd->bnd"}> : () -> ()
    %cst_14 = arith.constant dense<0.000000e+00> : vector<2x128x128xf32>
    %19 = tpu.matmul %0, %18, %cst_14 {dimension_numbers = #tpu.dot_dimension_numbers<[2], [1], [1], [2], [0, 0, 0, 1, 1, 2], [0], [0]>} : vector<2x128x128xbf16>, vector<2x128x128xbf16>, vector<2x128x128xf32> -> vector<2x128x128xf32>
    "tpu.trace_stop"() : () -> ()
    %20 = vector.shape_cast %19 : vector<2x128x128xf32> to vector<256x128xf32>
    %c0_15 = arith.constant 0 : index
    %c0_16 = arith.constant 0 : index
    %21 = vector.load %arg6[%c0_15, %c0_16] : memref<1x128xf32, #tpu.memory_space<vmem>>, vector<1x128xf32>
    %22 = vector.broadcast %21 : vector<1x128xf32> to vector<256x128xf32>
    %23 = arith.addf %20, %22 : vector<256x128xf32>
    %cst_17 = arith.constant 0.000000e+00 : f32
    %24 = vector.broadcast %cst_17 : f32 to vector<256x128xf32>
    %25 = arith.maximumf %23, %24 : vector<256x128xf32>
    %26 = arith.truncf %25 : vector<256x128xf32> to vector<256x128xbf16>
    %c0_18 = arith.constant 0 : index
    %c0_19 = arith.constant 0 : index
    %27 = vector.load %arg7[%c0_18, %c0_19] : memref<128x128xbf16, #tpu.memory_space<vmem>>, vector<128x128xbf16>
    %cst_20 = arith.constant dense<0.000000e+00> : vector<256x128xf32>
    %28 = tpu.matmul %26, %27, %cst_20 {dimension_numbers = #tpu.dot_dimension_numbers<[1], [0], [0], [1], [0, 0, 1, 1], [], []>} : vector<256x128xbf16>, vector<128x128xbf16>, vector<256x128xf32> -> vector<256x128xf32>
    %29 = arith.truncf %28 : vector<256x128xf32> to vector<256x128xbf16>
    %30 = vector.shape_cast %29 : vector<256x128xbf16> to vector<2x128x128xbf16>
    "tpu.trace_start"() <{level = 10 : i32, message = "bnm,bmd->bnd"}> : () -> ()
    %cst_21 = arith.constant dense<0.000000e+00> : vector<2x128x128xf32>
    %31 = tpu.matmul %0, %30, %cst_21 {dimension_numbers = #tpu.dot_dimension_numbers<[2], [1], [1], [2], [0, 0, 0, 1, 1, 2], [0], [0]>} : vector<2x128x128xbf16>, vector<2x128x128xbf16>, vector<2x128x128xf32> -> vector<2x128x128xf32>
    "tpu.trace_stop"() : () -> ()
    %32 = vector.shape_cast %31 : vector<2x128x128xf32> to vector<256x128xf32>
    %c0_22 = arith.constant 0 : index
    %c0_23 = arith.constant 0 : index
    %33 = vector.load %arg8[%c0_22, %c0_23] : memref<1x128xf32, #tpu.memory_space<vmem>>, vector<1x128xf32>
    %34 = vector.broadcast %33 : vector<1x128xf32> to vector<256x128xf32>
    %35 = arith.addf %32, %34 : vector<256x128xf32>
    %36 = arith.truncf %35 : vector<256x128xf32> to vector<256x128xbf16>
    %37 = vector.shape_cast %36 : vector<256x128xbf16> to vector<2x128x128xbf16>
    %c0_24 = arith.constant 0 : index
    %c0_25 = arith.constant 0 : index
    %c0_26 = arith.constant 0 : index
    %38 = vector.load %arg9[%c0_24, %c0_25, %c0_26] : memref<2x128x128xbf16, #tpu.memory_space<vmem>>, vector<2x128x128xbf16>
    tpu.vector_store %arg9[%c0_24, %c0_25, %c0_26], %37 {strides = array<i32>} : memref<2x128x128xbf16, #tpu.memory_space<vmem>>, vector<2x128x128xbf16>,
    return
  }
  func.func @transform_0(%arg0: i32) -> (i32, i32, i32) {
    %c0_i32 = arith.constant 0 : i32
    %c0_i32_0 = arith.constant 0 : i32
    %c0_i32_1 = arith.constant 0 : i32
    return %arg0, %c0_i32, %c0_i32_0 : i32, i32, i32
  }
  func.func @transform_1(%arg0: i32) -> (i32, i32, i32) {
    %c0_i32 = arith.constant 0 : i32
    %c0_i32_0 = arith.constant 0 : i32
    %c0_i32_1 = arith.constant 0 : i32
    return %arg0, %c0_i32, %c0_i32_0 : i32, i32, i32
  }
  func.func @transform_2(%arg0: i32) -> (i32, i32) {
    %c0_i32 = arith.constant 0 : i32
    %c0_i32_0 = arith.constant 0 : i32
    %c0_i32_1 = arith.constant 0 : i32
    return %c0_i32, %c0_i32_0 : i32, i32
  }
  func.func @transform_3(%arg0: i32) -> (i32, i32) {
    %c0_i32 = arith.constant 0 : i32
    %c0_i32_0 = arith.constant 0 : i32
    %c0_i32_1 = arith.constant 0 : i32
    return %c0_i32, %c0_i32_0 : i32, i32
  }
  func.func @transform_4(%arg0: i32) -> (i32, i32) {
    %c0_i32 = arith.constant 0 : i32
    %c0_i32_0 = arith.constant 0 : i32
    %c0_i32_1 = arith.constant 0 : i32
    return %c0_i32, %c0_i32_0 : i32, i32
  }
  func.func @transform_5(%arg0: i32) -> (i32, i32) {
    %c0_i32 = arith.constant 0 : i32
    %c0_i32_0 = arith.constant 0 : i32
    %c0_i32_1 = arith.constant 0 : i32
    return %c0_i32, %c0_i32_0 : i32, i32
  }
  func.func @transform_6(%arg0: i32) -> (i32, i32) {
    %c0_i32 = arith.constant 0 : i32
    %c0_i32_0 = arith.constant 0 : i32
    %c0_i32_1 = arith.constant 0 : i32
    return %c0_i32, %c0_i32_0 : i32, i32
  }
  func.func @transform_7(%arg0: i32) -> (i32, i32) {
    %c0_i32 = arith.constant 0 : i32
    %c0_i32_0 = arith.constant 0 : i32
    %c0_i32_1 = arith.constant 0 : i32
    return %c0_i32, %c0_i32_0 : i32, i32
  }
  func.func @transform_8(%arg0: i32) -> (i32, i32, i32) {
    %c0_i32 = arith.constant 0 : i32
    %c0_i32_0 = arith.constant 0 : i32
    %c0_i32_1 = arith.constant 0 : i32
    return %arg0, %c0_i32, %c0_i32_0 : i32, i32, i32
  }
}

</mosaic_0001>

<llo_original>
// kernel: tpu_custom_call.1
$region0: #{tpu_custom_call.1}
  #allocation0 [shape = 'u32[]', space=smem, size = 0x4, offset = 0x4, fixed_abs, tag = 'smem constant byte address 0x4 - core index']
  #allocation1 [shape = 'u32[144,128]{1,0:T(1,128)}', space=vmem, size = 0x12000, scoped, tag = 'internal scratch']
  %s0 = inlined_call_operand.hbm [shape: bf16[4,128,128], index: 0, kind: input, shape index: {}]
  %s1 = inlined_call_operand.hbm [shape: bf16[4,128,128], index: 1, kind: input, shape index: {}]
  %s2 = inlined_call_operand.hbm [shape: bf16[128,128], index: 2, kind: input, shape index: {}]
  %s3 = inlined_call_operand.vmem [shape: f32[1,128], index: 3, kind: input, shape index: {}]
  %s4 = inlined_call_operand.hbm [shape: bf16[128,128], index: 4, kind: input, shape index: {}]
  %s5 = inlined_call_operand.vmem [shape: f32[1,128], index: 5, kind: input, shape index: {}]
  %s6 = inlined_call_operand.hbm [shape: bf16[128,128], index: 6, kind: input, shape index: {}]
  %s7 = inlined_call_operand.vmem [shape: f32[1,128], index: 7, kind: input, shape index: {}]
  %s8 = inlined_call_operand.hbm [shape: bf16[4,128,128], index: 8, kind: output, shape index: {}]
  %s9 = sld [smem:[#allocation0]]
  $region85: #{tpu_custom_call.1} parent=0
    _
  %s11 = ssub.s32 1, %s9
  %s12 = scalar_select 0, %s11, %s9
  $region1: #{tpu_custom_call.1} parent=0
    #allocation2 [shape = 'u8[131072]{0}', space=vmem, size = 0x20000, scoped, tag = 'input window, operand 0']
    #allocation3 [shape = 's32[2]{0}', space=sflag, size = 0x8, scoped, tag = 'scoped memory for tpu_custom_call.1']
    #allocation4 [shape = 's32[2]{0}', space=sflag, size = 0x8, scoped, tag = 'scoped memory for tpu_custom_call.1']
    #allocation5 [shape = 'u8[131072]{0}', space=vmem, size = 0x20000, scoped, tag = 'input window, operand 1']
    #allocation6 [shape = 's32[2]{0}', space=sflag, size = 0x8, scoped, tag = 'scoped memory for tpu_custom_call.1']
    #allocation7 [shape = 'u8[32768]{0}', space=vmem, size = 0x8000, scoped, tag = 'input window, operand 2, single buffered']
    #allocation8 [shape = 'u8[32768]{0}', space=vmem, size = 0x8000, scoped, tag = 'input window, operand 4, single buffered']
    #allocation9 [shape = 's32[1]{0}', space=sflag, size = 0x4, scoped, tag = 'scoped memory for tpu_custom_call.1']
    #allocation10 [shape = 'u8[32768]{0}', space=vmem, size = 0x8000, scoped, tag = 'input window, operand 6, single buffered']
    #allocation11 [shape = 'u8[131072]{0}', space=vmem, size = 0x20000, scoped, tag = 'output window, operand 0']
    %13 = vsyncpa [#allocation3], 0
    %s14 = scalar_lea.sflag [#allocation3], 1
    %15 = vsyncpa %s14, 0
    %16 = vsyncpa [#allocation6], 0
    %s17 = scalar_lea.sflag [#allocation6], 1
    %18 = vsyncpa %s17, 0
    %19 = vsyncpa [#allocation9], 0
    %20 = vsyncpa [#allocation4], 0
    %s21 = scalar_lea.sflag [#allocation4], 1
    %22 = vsyncpa %s21, 0
    loop: start=0, step=1, limit=4
    $region2: #{tpu_custom_call.1} parent=1 // loop_pre_header
      _
    $region3: #{tpu_custom_call.1} parent=1 // loop_header
      %s24 = sphi 0, %s28
      %p25 = scmp.ge.s32.totalorder %s24, 4
      %s34 = sphi 0, %s36
      %s37 = sphi 0, %s34
      %s38 = sphi 0, %s37
      %s54 = sphi 0, %s38
      %s60 = sphi 0, %s62
      %s63 = sphi 0, %s60
      %s64 = sphi 0, %s63
      %s80 = sphi 0, %s64
      %s84 = sphi 0, %s84
      %s86 = sphi 0, %s84
      %s87 = sphi 0, %s86
      %s101 = sphi 0, %s87
      %s105 = sphi 0, %s105
      %s107 = sphi 0, %s105
      %s108 = sphi 0, %s107
      %s122 = sphi 0, %s108
      %s126 = sphi 0, %s126
      %s128 = sphi 0, %s126
      %s129 = sphi 0, %s128
      %s143 = sphi 0, %s129
      %s147 = sphi 0, %s147
      %s149 = sphi 0, %s147
      %s150 = sphi 0, %s149
      %s164 = sphi 0, %s150
      %s168 = sphi 0, %s168
      %s170 = sphi 0, %s168
      %s171 = sphi 0, %s170
      %s185 = sphi 0, %s171
      %s189 = sphi 0, %s189
      %s191 = sphi 0, %s189
      %s192 = sphi 0, %s191
      %s206 = sphi 0, %s192
      %s212 = sphi 0, %s214
      %s215 = sphi 0, %s212
      %s216 = sphi 0, %s215
      %s232 = sphi 0, %s216
    $region4: #{tpu_custom_call.1} parent=1 // loop_header_branch
      %27 = sbr.rel (%p25) target = $region8
    $region5: #{tpu_custom_call.1} parent=1 // loop_body
      %s29 = ssub.s32 %s24, 1
      %s30 = ssub.s32 %s24, 2
      %s31 = sadd.s32 %s24, 1
      %s32 = ssub.s32 %s24, %s31
      %p33 = scmp.eq.s32.totalorder %s32, 0
      %s35 = sadd.s32 %s34, 1
      %s36 = scalar_select %p33, %s34, %s35
      %p39 = pneg %p33
      %p40 = scmp.eq.s32.totalorder %s24, 1
      %p41 = por %p39, %p40
      %p42 = scmp.ne.s32.totalorder %s34, %s37
      %p43 = scmp.eq.s32.totalorder %s24, 0
      %p44 = por %p42, %p43
      %p45 = scmp.ne.s32.totalorder %s34, %s37
      %p46 = scmp.eq.s32.totalorder %s29, 1
      %p47 = por %p45, %p46
      %p48 = scmp.ne.s32.totalorder %s37, %s38
      %p49 = scmp.eq.s32.totalorder %s29, 0
      %p50 = por %p48, %p49
      %p51 = scmp.ne.s32.totalorder %s37, %s38
      %p52 = scmp.eq.s32.totalorder %s30, 1
      %p53 = por %p51, %p52
      %p55 = scmp.ne.s32.totalorder %s38, %s54
      %p56 = scmp.eq.s32.totalorder %s30, 0
      %p57 = por %p55, %p56
      %s58 = ssub.s32 %s24, %s31
      %p59 = scmp.eq.s32.totalorder %s58, 0
      %s61 = sadd.s32 %s60, 1
      %s62 = scalar_select %p59, %s60, %s61
      %p65 = pneg %p59
      %p66 = scmp.eq.s32.totalorder %s24, 1
      %p67 = por %p65, %p66
      %p68 = scmp.ne.s32.totalorder %s60, %s63
      %p69 = scmp.eq.s32.totalorder %s24, 0
      %p70 = por %p68, %p69
      %p71 = scmp.ne.s32.totalorder %s60, %s63
      %p72 = scmp.eq.s32.totalorder %s29, 1
      %p73 = por %p71, %p72
      %p74 = scmp.ne.s32.totalorder %s63, %s64
      %p75 = scmp.eq.s32.totalorder %s29, 0
      %p76 = por %p74, %p75
      %p77 = scmp.ne.s32.totalorder %s63, %s64
      %p78 = scmp.eq.s32.totalorder %s30, 1
      %p79 = por %p77, %p78
      %p81 = scmp.ne.s32.totalorder %s64, %s80
      %p82 = scmp.eq.s32.totalorder %s30, 0
      %p83 = por %p81, %p82
      %s85 = sadd.s32 %s84, 1
      %p88 = scmp.eq.s32.totalorder %s24, 1
      %p89 = scmp.ne.s32.totalorder %s84, %s86
      %p90 = scmp.eq.s32.totalorder %s24, 0
      %p91 = por %p89, %p90
      %p92 = scmp.ne.s32.totalorder %s84, %s86
      %p93 = scmp.eq.s32.totalorder %s29, 1
      %p94 = por %p92, %p93
      %p95 = scmp.ne.s32.totalorder %s86, %s87
      %p96 = scmp.eq.s32.totalorder %s29, 0
      %p97 = por %p95, %p96
      %p98 = scmp.ne.s32.totalorder %s86, %s87
      %p99 = scmp.eq.s32.totalorder %s30, 1
      %p100 = por %p98, %p99
      %p102 = scmp.ne.s32.totalorder %s87, %s101
      %p103 = scmp.eq.s32.totalorder %s30, 0
      %p104 = por %p102, %p103
      %s106 = sadd.s32 %s105, 1
      %p109 = scmp.eq.s32.totalorder %s24, 1
      %p110 = scmp.ne.s32.totalorder %s105, %s107
      %p111 = scmp.eq.s32.totalorder %s24, 0
      %p112 = por %p110, %p111
      %p113 = scmp.ne.s32.totalorder %s105, %s107
      %p114 = scmp.eq.s32.totalorder %s29, 1
      %p115 = por %p113, %p114
      %p116 = scmp.ne.s32.totalorder %s107, %s108
      %p117 = scmp.eq.s32.totalorder %s29, 0
      %p118 = por %p116, %p117
      %p119 = scmp.ne.s32.totalorder %s107, %s108
      %p120 = scmp.eq.s32.totalorder %s30, 1
      %p121 = por %p119, %p120
      %p123 = scmp.ne.s32.totalorder %s108, %s122
      %p124 = scmp.eq.s32.totalorder %s30, 0
      %p125 = por %p123, %p124
      %s127 = sadd.s32 %s126, 1
      %p130 = scmp.eq.s32.totalorder %s24, 1
      %p131 = scmp.ne.s32.totalorder %s126, %s128
      %p132 = scmp.eq.s32.totalorder %s24, 0
      %p133 = por %p131, %p132
      %p134 = scmp.ne.s32.totalorder %s126, %s128
      %p135 = scmp.eq.s32.totalorder %s29, 1
      %p136 = por %p134, %p135
      %p137 = scmp.ne.s32.totalorder %s128, %s129
      %p138 = scmp.eq.s32.totalorder %s29, 0
      %p139 = por %p137, %p138
      %p140 = scmp.ne.s32.totalorder %s128, %s129
      %p141 = scmp.eq.s32.totalorder %s30, 1
      %p142 = por %p140, %p141
      %p144 = scmp.ne.s32.totalorder %s129, %s143
      %p145 = scmp.eq.s32.totalorder %s30, 0
      %p146 = por %p144, %p145
      %s148 = sadd.s32 %s147, 1
      %p151 = scmp.eq.s32.totalorder %s24, 1
      %p152 = scmp.ne.s32.totalorder %s147, %s149
      %p153 = scmp.eq.s32.totalorder %s24, 0
      %p154 = por %p152, %p153
      %p155 = scmp.ne.s32.totalorder %s147, %s149
      %p156 = scmp.eq.s32.totalorder %s29, 1
      %p157 = por %p155, %p156
      %p158 = scmp.ne.s32.totalorder %s149, %s150
      %p159 = scmp.eq.s32.totalorder %s29, 0
      %p160 = por %p158, %p159
      %p161 = scmp.ne.s32.totalorder %s149, %s150
      %p162 = scmp.eq.s32.totalorder %s30, 1
      %p163 = por %p161, %p162
      %p165 = scmp.ne.s32.totalorder %s150, %s164
      %p166 = scmp.eq.s32.totalorder %s30, 0
      %p167 = por %p165, %p166
      %s169 = sadd.s32 %s168, 1
      %p172 = scmp.eq.s32.totalorder %s24, 1
      %p173 = scmp.ne.s32.totalorder %s168, %s170
      %p174 = scmp.eq.s32.totalorder %s24, 0
      %p175 = por %p173, %p174
      %p176 = scmp.ne.s32.totalorder %s168, %s170
      %p177 = scmp.eq.s32.totalorder %s29, 1
      %p178 = por %p176, %p177
      %p179 = scmp.ne.s32.totalorder %s170, %s171
      %p180 = scmp.eq.s32.totalorder %s29, 0
      %p181 = por %p179, %p180
      %p182 = scmp.ne.s32.totalorder %s170, %s171
      %p183 = scmp.eq.s32.totalorder %s30, 1
      %p184 = por %p182, %p183
      %p186 = scmp.ne.s32.totalorder %s171, %s185
      %p187 = scmp.eq.s32.totalorder %s30, 0
      %p188 = por %p186, %p187
      %s190 = sadd.s32 %s189, 1
      %p193 = scmp.eq.s32.totalorder %s24, 1
      %p194 = scmp.ne.s32.totalorder %s189, %s191
      %p195 = scmp.eq.s32.totalorder %s24, 0
      %p196 = por %p194, %p195
      %p197 = scmp.ne.s32.totalorder %s189, %s191
      %p198 = scmp.eq.s32.totalorder %s29, 1
      %p199 = por %p197, %p198
      %p200 = scmp.ne.s32.totalorder %s191, %s192
      %p201 = scmp.eq.s32.totalorder %s29, 0
      %p202 = por %p200, %p201
      %p203 = scmp.ne.s32.totalorder %s191, %s192
      %p204 = scmp.eq.s32.totalorder %s30, 1
      %p205 = por %p203, %p204
      %p207 = scmp.ne.s32.totalorder %s192, %s206
      %p208 = scmp.eq.s32.totalorder %s30, 0
      %p209 = por %p207, %p208
      %s210 = ssub.s32 %s24, %s31
      %p211 = scmp.eq.s32.totalorder %s210, 0
      %s213 = sadd.s32 %s212, 1
      %s214 = scalar_select %p211, %s212, %s213
      %p217 = pneg %p211
      %p218 = scmp.eq.s32.totalorder %s24, 1
      %p219 = por %p217, %p218
      %p220 = scmp.ne.s32.totalorder %s212, %s215
      %p221 = scmp.eq.s32.totalorder %s24, 0
      %p222 = por %p220, %p221
      %p223 = scmp.ne.s32.totalorder %s212, %s215
      %p224 = scmp.eq.s32.totalorder %s29, 1
      %p225 = por %p223, %p224
      %p226 = scmp.ne.s32.totalorder %s215, %s216
      %p227 = scmp.eq.s32.totalorder %s29, 0
      %p228 = por %p226, %p227
      %p229 = scmp.ne.s32.totalorder %s215, %s216
      %p230 = scmp.eq.s32.totalorder %s30, 1
      %p231 = por %p229, %p230
      %p233 = scmp.ne.s32.totalorder %s216, %s232
      %p234 = scmp.eq.s32.totalorder %s30, 0
      %p235 = por %p233, %p234
      %p236 = scmp.le.s32.totalorder 1, %s24
      %p237 = scmp.lt.s32.totalorder %s24, 3
      %p238 = pnand %p236, %p237
      %p239 = pneg %p238
      // Predicated region
      $region9: #{tpu_custom_call.1} parent=5 // pred_check
        _
      $region10: #{tpu_custom_call.1} parent=5 // pred_check_branch
        %241 = sbr.rel (%p238) target = $region12
      $region11: #{tpu_custom_call.1} parent=5 // pred_region
        %s242 = ssub.s32 %s24, 1
        // Predicated region
        $region13: #{tpu_custom_call.1} parent=11 // pred_check
          %p243 = pneg %p97
        $region14: #{tpu_custom_call.1} parent=11 // pred_check_branch
          %245 = sbr.rel (%p243) target = $region16
        $region15: #{tpu_custom_call.1} parent=11 // pred_region
          %s247 = ssub.s32 1024, 1024
          %248 = vsyncadd [#allocation6], %s247
          %s249 = sshll.u32 [#allocation7], 4
          %s250 = int_to_ptr.vmem [resolvable:$true] %s249
          %255 = dma.hbm_to_vmem [thread:$0]  %s2, 1024, %s250, [#allocation6], 64, 64, 4
        $region16: #{tpu_custom_call.1} parent=11 // pred_fallthru
          _
        // Predicated region
        $region17: #{tpu_custom_call.1} parent=11 // pred_check
          %p256 = pneg %p118
        $region18: #{tpu_custom_call.1} parent=11 // pred_check_branch
          %258 = sbr.rel (%p256) target = $region20
        $region19: #{tpu_custom_call.1} parent=11 // pred_region
          _
        $region20: #{tpu_custom_call.1} parent=11 // pred_fallthru
          _
        // Predicated region
        $region21: #{tpu_custom_call.1} parent=11 // pred_check
          %p259 = pneg %p139
        $region22: #{tpu_custom_call.1} parent=11 // pred_check_branch
          %261 = sbr.rel (%p259) target = $region24
        $region23: #{tpu_custom_call.1} parent=11 // pred_region
          %s263 = ssub.s32 1024, 1024
          %264 = vsyncadd [#allocation9], %s263
          %s265 = sshll.u32 [#allocation8], 4
          %s266 = int_to_ptr.vmem [resolvable:$true] %s265
          %271 = dma.hbm_to_vmem [thread:$0]  %s4, 1024, %s266, [#allocation9], 64, 64, 4
        $region24: #{tpu_custom_call.1} parent=11 // pred_fallthru
          _
        // Predicated region
        $region25: #{tpu_custom_call.1} parent=11 // pred_check
          %p272 = pneg %p160
        $region26: #{tpu_custom_call.1} parent=11 // pred_check_branch
          %274 = sbr.rel (%p272) target = $region28
        $region27: #{tpu_custom_call.1} parent=11 // pred_region
          _
        $region28: #{tpu_custom_call.1} parent=11 // pred_fallthru
          _
        // Predicated region
        $region29: #{tpu_custom_call.1} parent=11 // pred_check
          %p275 = pneg %p181
        $region30: #{tpu_custom_call.1} parent=11 // pred_check_branch
          %277 = sbr.rel (%p275) target = $region32
        $region31: #{tpu_custom_call.1} parent=11 // pred_region
          %s279 = ssub.s32 1024, 1024
          %280 = vsyncadd [#allocation9], %s279
          %s281 = sshll.u32 [#allocation10], 4
          %s282 = int_to_ptr.vmem [resolvable:$true] %s281
          %287 = dma.hbm_to_vmem [thread:$0]  %s6, 1024, %s282, [#allocation9], 64, 64, 4
        $region32: #{tpu_custom_call.1} parent=11 // pred_fallthru
          _
        // Predicated region
        $region33: #{tpu_custom_call.1} parent=11 // pred_check
          %p288 = pneg %p202
        $region34: #{tpu_custom_call.1} parent=11 // pred_check_branch
          %290 = sbr.rel (%p288) target = $region36
        $region35: #{tpu_custom_call.1} parent=11 // pred_region
          _
        $region36: #{tpu_custom_call.1} parent=11 // pred_fallthru
          _
      $region12: #{tpu_custom_call.1} parent=5 // pred_fallthru
        _
      %p291 = scmp.lt.s32.totalorder %s24, 2
      // Predicated region
      $region37: #{tpu_custom_call.1} parent=5 // pred_check
        %p292 = pneg %p291
      $region38: #{tpu_custom_call.1} parent=5 // pred_check_branch
        %294 = sbr.rel (%p292) target = $region40
      $region39: #{tpu_custom_call.1} parent=5 // pred_region
        // Predicated region
        $region41: #{tpu_custom_call.1} parent=39 // pred_check
          %p295 = pneg %p44
        $region42: #{tpu_custom_call.1} parent=39 // pred_check_branch
          %297 = sbr.rel (%p295) target = $region44
        $region43: #{tpu_custom_call.1} parent=39 // pred_region
          %s298 = sand.u32 %s34, 1
          %s299 = scalar_lea.sflag [#allocation3], %s298
          %s300 = sand.u32 %s34, 1
          %s301 = smul.addr %s300, 128
          %s302 = scalar_lea.vmem [#allocation2], %s301
          %s303 = smul.u32 2, %s24
          %s305 = ssub.s32 2048, 2048
          %306 = vsyncadd %s299, %s305
          %s307 = smul.addr %s303, 16
          %s308 = smul.addr %s307, 64
          %s309 = scalar_lea.hbm %s0, %s308
          %s310 = sshll.u32 %s302, 4
          %s311 = int_to_ptr.vmem [resolvable:$true] %s310
          %316 = dma.hbm_to_vmem [thread:$0]  %s309, 2048, %s311, %s299, 64, 64, 4
        $region44: #{tpu_custom_call.1} parent=39 // pred_fallthru
          _
        // Predicated region
        $region45: #{tpu_custom_call.1} parent=39 // pred_check
          %p317 = pneg %p70
        $region46: #{tpu_custom_call.1} parent=39 // pred_check_branch
          %319 = sbr.rel (%p317) target = $region48
        $region47: #{tpu_custom_call.1} parent=39 // pred_region
          %s320 = sand.u32 %s24, 1
          %s321 = scalar_lea.sflag [#allocation6], %s320
          %s322 = sand.u32 %s60, 1
          %s323 = smul.addr %s322, 128
          %s324 = scalar_lea.vmem [#allocation5], %s323
          %s325 = smul.u32 2, %s24
          %s327 = ssub.s32 2048, 2048
          %328 = vsyncadd %s321, %s327
          %s329 = smul.addr %s325, 16
          %s330 = smul.addr %s329, 64
          %s331 = scalar_lea.hbm %s1, %s330
          %s332 = sshll.u32 %s324, 4
          %s333 = int_to_ptr.vmem [resolvable:$true] %s332
          %338 = dma.hbm_to_vmem [thread:$0]  %s331, 2048, %s333, %s321, 64, 64, 4
        $region48: #{tpu_custom_call.1} parent=39 // pred_fallthru
          _
      $region40: #{tpu_custom_call.1} parent=5 // pred_fallthru
        _
      %p339 = scmp.le.s32.totalorder 1, %s24
      %p340 = scmp.lt.s32.totalorder %s24, 3
      %p341 = pnand %p339, %p340
      %p342 = pneg %p341
      // Predicated region
      $region49: #{tpu_custom_call.1} parent=5 // pred_check
        _
      $region50: #{tpu_custom_call.1} parent=5 // pred_check_branch
        %344 = sbr.rel (%p341) target = $region52
      $region51: #{tpu_custom_call.1} parent=5 // pred_region
        %s345 = ssub.s32 %s24, 1
        %s346 = sand.u32 %s37, 1
        %s347 = scalar_lea.sflag [#allocation3], %s346
        %s348 = sand.u32 %s37, 1
        %s349 = smul.addr %s348, 128
        %s350 = scalar_lea.vmem [#allocation2], %s349
        // Predicated region
        $region53: #{tpu_custom_call.1} parent=51 // pred_check
          %p351 = pneg %p50
        $region54: #{tpu_custom_call.1} parent=51 // pred_check_branch
          %353 = sbr.rel (%p351) target = $region56
        $region55: #{tpu_custom_call.1} parent=51 // pred_region
          %354 = dma.done %s347, 2048
        $region56: #{tpu_custom_call.1} parent=51 // pred_fallthru
          _
        %s355 = sand.u32 %s29, 1
        %s356 = scalar_lea.sflag [#allocation6], %s355
        %s357 = sand.u32 %s63, 1
        %s358 = smul.addr %s357, 128
        %s359 = scalar_lea.vmem [#allocation5], %s358
        // Predicated region
        $region57: #{tpu_custom_call.1} parent=51 // pred_check
          %p360 = pneg %p76
        $region58: #{tpu_custom_call.1} parent=51 // pred_check_branch
          %362 = sbr.rel (%p360) target = $region60
        $region59: #{tpu_custom_call.1} parent=51 // pred_region
          %363 = dma.done %s356, 2048
        $region60: #{tpu_custom_call.1} parent=51 // pred_fallthru
          _
        // Predicated region
        $region61: #{tpu_custom_call.1} parent=51 // pred_check
          %p364 = pneg %p97
        $region62: #{tpu_custom_call.1} parent=51 // pred_check_branch
          %366 = sbr.rel (%p364) target = $region64
        $region63: #{tpu_custom_call.1} parent=51 // pred_region
          %367 = dma.done [#allocation6], 1024
        $region64: #{tpu_custom_call.1} parent=51 // pred_fallthru
          _
        // Predicated region
        $region65: #{tpu_custom_call.1} parent=51 // pred_check
          %p368 = pneg %p139
        $region66: #{tpu_custom_call.1} parent=51 // pred_check_branch
          %370 = sbr.rel (%p368) target = $region68
        $region67: #{tpu_custom_call.1} parent=51 // pred_region
          %371 = dma.done [#allocation9], 1024
        $region68: #{tpu_custom_call.1} parent=51 // pred_fallthru
          _
        // Predicated region
        $region69: #{tpu_custom_call.1} parent=51 // pred_check
          %p372 = pneg %p181
        $region70: #{tpu_custom_call.1} parent=51 // pred_check_branch
          %374 = sbr.rel (%p372) target = $region72
        $region71: #{tpu_custom_call.1} parent=51 // pred_region
          %375 = dma.done [#allocation9], 1024
        $region72: #{tpu_custom_call.1} parent=51 // pred_fallthru
          _
        %s376 = sand.u32 %s37, 1
        %s377 = scalar_lea.sflag [#allocation3], %s376
        %s378 = sand.u32 %s37, 1
        %s379 = smul.addr %s378, 128
        %s380 = scalar_lea.vmem [#allocation2], %s379
        %p381 = pneg %p50
        %p382 = pneg %p47
        %s383 = sand.u32 %s29, 1
        %s384 = scalar_lea.sflag [#allocation6], %s383
        %s385 = sand.u32 %s63, 1
        %s386 = smul.addr %s385, 128
        %s387 = scalar_lea.vmem [#allocation5], %s386
        %p388 = pneg %p76
        %p389 = pneg %p73
        %p390 = pneg %p97
        %p391 = pneg %p94
        %p392 = pneg %p118
        %p393 = pneg %p115
        %p394 = pneg %p139
        %p395 = pneg %p136
        %p396 = pneg %p160
        %p397 = pneg %p157
        %p398 = pneg %p181
        %p399 = pneg %p178
        %p400 = pneg %p202
        %p401 = pneg %p199
        %p402 = pneg %p228
        %p403 = pneg %p225
        %s404 = sand.u32 %s215, 1
        %s405 = scalar_lea.sflag [#allocation4], %s404
        %s406 = sand.u32 %s215, 1
        %s407 = smul.addr %s406, 128
        %s408 = scalar_lea.vmem [#allocation11], %s407
        %s409 = smul.u32 2, %s29
        %s410 = smul.u32 2, %s29
        %s411 = smul.u32 2, %s29
        %v413 = vld [vmem:[%s359] sm:$0xf]
        %v414 = vld [vmem:[%s359 + $0x4] sm:$0xf]
        %v415 = vld [vmem:[%s359 + $0x8] sm:$0xf]
        %v416 = vld [vmem:[%s359 + $0xc] sm:$0xf]
        %v417 = vld [vmem:[%s359 + $0x10] sm:$0xf]
        %v418 = vld [vmem:[%s359 + $0x14] sm:$0xf]
        %v419 = vld [vmem:[%s359 + $0x18] sm:$0xf]
        %v420 = vld [vmem:[%s359 + $0x1c] sm:$0xf]
        %v421 = vld [vmem:[%s359 + $0x20] sm:$0xf]
        %v422 = vld [vmem:[%s359 + $0x24] sm:$0xf]
        %v423 = vld [vmem:[%s359 + $0x28] sm:$0xf]
        %v424 = vld [vmem:[%s359 + $0x2c] sm:$0xf]
        %v425 = vld [vmem:[%s359 + $0x30] sm:$0xf]
        %v426 = vld [vmem:[%s359 + $0x34] sm:$0xf]
        %v427 = vld [vmem:[%s359 + $0x38] sm:$0xf]
        %v428 = vld [vmem:[%s359 + $0x3c] sm:$0xf]
        %v429 = vld [vmem:[%s359 + $0x40] sm:$0xf]
        %v430 = vld [vmem:[%s359 + $0x44] sm:$0xf]
        %v431 = vld [vmem:[%s359 + $0x48] sm:$0xf]
        %v432 = vld [vmem:[%s359 + $0x4c] sm:$0xf]
        %v433 = vld [vmem:[%s359 + $0x50] sm:$0xf]
        %v434 = vld [vmem:[%s359 + $0x54] sm:$0xf]
        %v435 = vld [vmem:[%s359 + $0x58] sm:$0xf]
        %v436 = vld [vmem:[%s359 + $0x5c] sm:$0xf]
        %v437 = vld [vmem:[%s359 + $0x60] sm:$0xf]
        %v438 = vld [vmem:[%s359 + $0x64] sm:$0xf]
        %v439 = vld [vmem:[%s359 + $0x68] sm:$0xf]
        %v440 = vld [vmem:[%s359 + $0x6c] sm:$0xf]
        %v441 = vld [vmem:[%s359 + $0x70] sm:$0xf]
        %v442 = vld [vmem:[%s359 + $0x74] sm:$0xf]
        %v443 = vld [vmem:[%s359 + $0x78] sm:$0xf]
        %v444 = vld [vmem:[%s359 + $0x7c] sm:$0xf]
        %v445 = vld [vmem:[%s350] sm:$0xf]
        %v446 = vld [vmem:[%s350 + $0x4] sm:$0xf]
        %v447 = vld [vmem:[%s350 + $0x8] sm:$0xf]
        %v448 = vld [vmem:[%s350 + $0xc] sm:$0xf]
        %v449 = vld [vmem:[%s350 + $0x10] sm:$0xf]
        %v450 = vld [vmem:[%s350 + $0x14] sm:$0xf]
        %v451 = vld [vmem:[%s350 + $0x18] sm:$0xf]
        %v452 = vld [vmem:[%s350 + $0x1c] sm:$0xf]
        %v453 = vld [vmem:[%s350 + $0x20] sm:$0xf]
        %v454 = vld [vmem:[%s350 + $0x24] sm:$0xf]
        %v455 = vld [vmem:[%s350 + $0x28] sm:$0xf]
        %v456 = vld [vmem:[%s350 + $0x2c] sm:$0xf]
        %v457 = vld [vmem:[%s350 + $0x30] sm:$0xf]
        %v458 = vld [vmem:[%s350 + $0x34] sm:$0xf]
        %v459 = vld [vmem:[%s350 + $0x38] sm:$0xf]
        %v460 = vld [vmem:[%s350 + $0x3c] sm:$0xf]
        %v461 = vld [vmem:[%s350 + $0x40] sm:$0xf]
        %v462 = vld [vmem:[%s350 + $0x44] sm:$0xf]
        %v463 = vld [vmem:[%s350 + $0x48] sm:$0xf]
        %v464 = vld [vmem:[%s350 + $0x4c] sm:$0xf]
        %v465 = vld [vmem:[%s350 + $0x50] sm:$0xf]
        %v466 = vld [vmem:[%s350 + $0x54] sm:$0xf]
        %v467 = vld [vmem:[%s350 + $0x58] sm:$0xf]
        %v468 = vld [vmem:[%s350 + $0x5c] sm:$0xf]
        %v469 = vld [vmem:[%s350 + $0x60] sm:$0xf]
        %v470 = vld [vmem:[%s350 + $0x64] sm:$0xf]
        %v471 = vld [vmem:[%s350 + $0x68] sm:$0xf]
        %v472 = vld [vmem:[%s350 + $0x6c] sm:$0xf]
        %v473 = vld [vmem:[%s350 + $0x70] sm:$0xf]
        %v474 = vld [vmem:[%s350 + $0x74] sm:$0xf]
        %v475 = vld [vmem:[%s350 + $0x78] sm:$0xf]
        %v476 = vld [vmem:[%s350 + $0x7c] sm:$0xf]
        %v477 = vld [vmem:[#allocation7] sm:$0xf]
        %v478 = vld [vmem:[#allocation7 + $0x4] sm:$0xf]
        %v479 = vld [vmem:[#allocation7 + $0x8] sm:$0xf]
        %v480 = vld [vmem:[#allocation7 + $0xc] sm:$0xf]
        %v481 = vld [vmem:[#allocation7 + $0x10] sm:$0xf]
        %v482 = vld [vmem:[#allocation7 + $0x14] sm:$0xf]
        %v483 = vld [vmem:[#allocation7 + $0x18] sm:$0xf]
        %v484 = vld [vmem:[#allocation7 + $0x1c] sm:$0xf]
        %v485 = vld [vmem:[#allocation7 + $0x20] sm:$0xf]
        %v486 = vld [vmem:[#allocation7 + $0x24] sm:$0xf]
        %v487 = vld [vmem:[#allocation7 + $0x28] sm:$0xf]
        %v488 = vld [vmem:[#allocation7 + $0x2c] sm:$0xf]
        %v489 = vld [vmem:[#allocation7 + $0x30] sm:$0xf]
        %v490 = vld [vmem:[#allocation7 + $0x34] sm:$0xf]
        %v491 = vld [vmem:[#allocation7 + $0x38] sm:$0xf]
        %v492 = vld [vmem:[#allocation7 + $0x3c] sm:$0xf]
        %v525 = vunpack.c.l.b16 %v445
        %v526 = vunpack.c.l.b16 %v446
        %v527 = vunpack.c.l.b16 %v447
        %v528 = vunpack.c.l.b16 %v448
        %v529 = vunpack.c.l.b16 %v449
        %v530 = vunpack.c.l.b16 %v450
        %v531 = vunpack.c.l.b16 %v451
        %v532 = vunpack.c.l.b16 %v452
        %v533 = vunpack.c.l.b16 %v453
        %v534 = vunpack.c.l.b16 %v454
        %v535 = vunpack.c.l.b16 %v455
        %v536 = vunpack.c.l.b16 %v456
        %v537 = vunpack.c.l.b16 %v457
        %v538 = vunpack.c.l.b16 %v458
        %v539 = vunpack.c.l.b16 %v459
        %v540 = vunpack.c.l.b16 %v460
        %v541 = vunpack.c.l.b16 %v461
        %v542 = vunpack.c.l.b16 %v462
        %v543 = vunpack.c.l.b16 %v463
        %v544 = vunpack.c.l.b16 %v464
        %v545 = vunpack.c.l.b16 %v465
        %v546 = vunpack.c.l.b16 %v466
        %v547 = vunpack.c.l.b16 %v467
        %v548 = vunpack.c.l.b16 %v468
        %v549 = vunpack.c.l.b16 %v469
        %v550 = vunpack.c.l.b16 %v470
        %v551 = vunpack.c.l.b16 %v471
        %v552 = vunpack.c.l.b16 %v472
        %v553 = vunpack.c.l.b16 %v473
        %v554 = vunpack.c.l.b16 %v474
        %v555 = vunpack.c.l.b16 %v475
        %v556 = vunpack.c.l.b16 %v476
        %v557 = vpack.c.b16 %v526, %v525
        %v558 = vpack.c.b16 %v528, %v527
        %v559 = vpack.c.b16 %v530, %v529
        %v560 = vpack.c.b16 %v532, %v531
        %v561 = vpack.c.b16 %v534, %v533
        %v562 = vpack.c.b16 %v536, %v535
        %v563 = vpack.c.b16 %v538, %v537
        %v564 = vpack.c.b16 %v540, %v539
        %v565 = vpack.c.b16 %v542, %v541
        %v566 = vpack.c.b16 %v544, %v543
        %v567 = vpack.c.b16 %v546, %v545
        %v568 = vpack.c.b16 %v548, %v547
        %v569 = vpack.c.b16 %v550, %v549
        %v570 = vpack.c.b16 %v552, %v551
        %v571 = vpack.c.b16 %v554, %v553
        %v572 = vpack.c.b16 %v556, %v555
        %v605 = vunpack.c.l.b16 %v477
        %v606 = vunpack.c.l.b16 %v478
        %v607 = vunpack.c.l.b16 %v479
        %v608 = vunpack.c.l.b16 %v480
        %v609 = vunpack.c.l.b16 %v481
        %v610 = vunpack.c.l.b16 %v482
        %v611 = vunpack.c.l.b16 %v483
        %v612 = vunpack.c.l.b16 %v484
        %v613 = vunpack.c.l.b16 %v485
        %v614 = vunpack.c.l.b16 %v486
        %v615 = vunpack.c.l.b16 %v487
        %v616 = vunpack.c.l.b16 %v488
        %v617 = vunpack.c.l.b16 %v489
        %v618 = vunpack.c.l.b16 %v490
        %v619 = vunpack.c.l.b16 %v491
        %v620 = vunpack.c.l.b16 %v492
        %v621 = vpack.c.b16 %v606, %v605
        %v622 = vpack.c.b16 %v608, %v607
        %v623 = vpack.c.b16 %v610, %v609
        %v624 = vpack.c.b16 %v612, %v611
        %v625 = vpack.c.b16 %v614, %v613
        %v626 = vpack.c.b16 %v616, %v615
        %v627 = vpack.c.b16 %v618, %v617
        %v628 = vpack.c.b16 %v620, %v619
        %637 = vmatprep.subr.bf16.mxu0 0
        %638 = vmatpush1.bf16.msra.mxu0 %v621
        %639 = vmatprep.subr.bf16.mxu0 0
        %640 = vmatpush1.bf16.msra.mxu0 %v622
        %641 = vmatprep.subr.bf16.mxu0 0
        %642 = vmatpush1.bf16.msra.mxu0 %v623
        %643 = vmatprep.subr.bf16.mxu0 0
        %644 = vmatpush1.bf16.msra.mxu0 %v624
        %645 = vmatprep.subr.bf16.mxu0 0
        %646 = vmatpush1.bf16.msra.mxu0 %v625
        %647 = vmatprep.subr.bf16.mxu0 0
        %648 = vmatpush1.bf16.msra.mxu0 %v626
        %649 = vmatprep.subr.bf16.mxu0 0
        %650 = vmatpush1.bf16.msra.mxu0 %v627
        %651 = vmatprep.subr.bf16.mxu0 0
        %652 = vmatpush1.bf16.msra.mxu0 %v628
        %653 = vmatprep.subr.bf16.mxu0 0
        %654 = vmatpush1.bf16.msra.mxu0 0
        %655 = vmatprep.subr.bf16.mxu0 0
        %656 = vmatpush1.bf16.msra.mxu0 0
        %657 = vmatprep.subr.bf16.mxu0 0
        %658 = vmatpush1.bf16.msra.mxu0 0
        %659 = vmatprep.subr.bf16.mxu0 0
        %660 = vmatpush1.bf16.msra.mxu0 0
        %661 = vmatprep.subr.bf16.mxu0 0
        %662 = vmatpush1.bf16.msra.mxu0 0
        %663 = vmatprep.subr.bf16.mxu0 0
        %664 = vmatpush1.bf16.msra.mxu0 0
        %665 = vmatprep.subr.bf16.mxu0 0
        %666 = vmatpush1.bf16.msra.mxu0 0
        %667 = vmatprep.subr.bf16.mxu0 0
        %668 = vmatpush1.bf16.msra.mxu0 0
        %669 = vmatprep.mubr.bf16.mxu0 0
        %670 = vmatmul.mubr.bf16.gmra.mrb[0].mxu0 %v557
        %v671 = vpop.f32.mrb[0].mxu0
        %v672 = vadd.f32 0.0, %v671
        %v673 = vpop.f32.mrb[0].mxu0
        %v674 = vpop.f32.mrb[0].mxu0
        %v675 = vadd.f32 0.0, %v674
        %v676 = vpop.f32.mrb[0].mxu0
        %677 = vmatprep.mubr.bf16.mxu0 0
        %678 = vmatmul.mubr.bf16.gmra.mrb[0].mxu0 %v558
        %v679 = vpop.f32.mrb[0].mxu0
        %v680 = vadd.f32 0.0, %v679
        %v681 = vpop.f32.mrb[0].mxu0
        %v682 = vpop.f32.mrb[0].mxu0
        %v683 = vadd.f32 0.0, %v682
        %v684 = vpop.f32.mrb[0].mxu0
        %685 = vmatprep.mubr.bf16.mxu0 0
        %686 = vmatmul.mubr.bf16.gmra.mrb[0].mxu0 %v559
        %v687 = vpop.f32.mrb[0].mxu0
        %v688 = vadd.f32 0.0, %v687
        %v689 = vpop.f32.mrb[0].mxu0
        %v690 = vpop.f32.mrb[0].mxu0
        %v691 = vadd.f32 0.0, %v690
        %v692 = vpop.f32.mrb[0].mxu0
        %693 = vmatprep.mubr.bf16.mxu0 0
        %694 = vmatmul.mubr.bf16.gmra.mrb[0].mxu0 %v560
        %v695 = vpop.f32.mrb[0].mxu0
        %v696 = vadd.f32 0.0, %v695
        %v697 = vpop.f32.mrb[0].mxu0
        %v698 = vpop.f32.mrb[0].mxu0
        %v699 = vadd.f32 0.0, %v698
        %v700 = vpop.f32.mrb[0].mxu0
        %701 = vmatprep.mubr.bf16.mxu0 0
        %702 = vmatmul.mubr.bf16.gmra.mrb[0].mxu0 %v561
        %v703 = vpop.f32.mrb[0].mxu0
        %v704 = vadd.f32 0.0, %v703
        %v705 = vpop.f32.mrb[0].mxu0
        %v706 = vpop.f32.mrb[0].mxu0
        %v707 = vadd.f32 0.0, %v706
        %v708 = vpop.f32.mrb[0].mxu0
        %709 = vmatprep.mubr.bf16.mxu0 0
        %710 = vmatmul.mubr.bf16.gmra.mrb[0].mxu0 %v562
        %v711 = vpop.f32.mrb[0].mxu0
        %v712 = vadd.f32 0.0, %v711
        %v713 = vpop.f32.mrb[0].mxu0
        %v714 = vpop.f32.mrb[0].mxu0
        %v715 = vadd.f32 0.0, %v714
        %v716 = vpop.f32.mrb[0].mxu0
        %717 = vmatprep.mubr.bf16.mxu0 0
        %718 = vmatmul.mubr.bf16.gmra.mrb[0].mxu0 %v563
        %v719 = vpop.f32.mrb[0].mxu0
        %v720 = vadd.f32 0.0, %v719
        %v721 = vpop.f32.mrb[0].mxu0
        %v722 = vpop.f32.mrb[0].mxu0
        %v723 = vadd.f32 0.0, %v722
        %v724 = vpop.f32.mrb[0].mxu0
        %725 = vmatprep.mubr.bf16.mxu0 0
        %726 = vmatmul.mubr.bf16.gmra.mrb[0].mxu0 %v564
        %v727 = vpop.f32.mrb[0].mxu0
        %v728 = vadd.f32 0.0, %v727
        %v729 = vpop.f32.mrb[0].mxu0
        %v730 = vpop.f32.mrb[0].mxu0
        %v731 = vadd.f32 0.0, %v730
        %v732 = vpop.f32.mrb[0].mxu0
        %733 = vmatprep.mubr.bf16.mxu0 0
        %734 = vmatmul.mubr.bf16.gmra.mrb[0].mxu0 %v565
        %v735 = vpop.f32.mrb[0].mxu0
        %v736 = vadd.f32 0.0, %v735
        %v737 = vpop.f32.mrb[0].mxu0
        %v738 = vpop.f32.mrb[0].mxu0
        %v739 = vadd.f32 0.0, %v738
        %v740 = vpop.f32.mrb[0].mxu0
        %741 = vmatprep.mubr.bf16.mxu0 0
        %742 = vmatmul.mubr.bf16.gmra.mrb[0].mxu0 %v566
        %v743 = vpop.f32.mrb[0].mxu0
        %v744 = vadd.f32 0.0, %v743
        %v745 = vpop.f32.mrb[0].mxu0
        %v746 = vpop.f32.mrb[0].mxu0
        %v747 = vadd.f32 0.0, %v746
        %v748 = vpop.f32.mrb[0].mxu0
        %749 = vmatprep.mubr.bf16.mxu0 0
        %750 = vmatmul.mubr.bf16.gmra.mrb[0].mxu0 %v567
        %v751 = vpop.f32.mrb[0].mxu0
        %v752 = vadd.f32 0.0, %v751
        %v753 = vpop.f32.mrb[0].mxu0
        %v754 = vpop.f32.mrb[0].mxu0
        %v755 = vadd.f32 0.0, %v754
        %v756 = vpop.f32.mrb[0].mxu0
        %757 = vmatprep.mubr.bf16.mxu0 0
        %758 = vmatmul.mubr.bf16.gmra.mrb[0].mxu0 %v568
        %v759 = vpop.f32.mrb[0].mxu0
        %v760 = vadd.f32 0.0, %v759
        %v761 = vpop.f32.mrb[0].mxu0
        %v762 = vpop.f32.mrb[0].mxu0
        %v763 = vadd.f32 0.0, %v762
        %v764 = vpop.f32.mrb[0].mxu0
        %765 = vmatprep.mubr.bf16.mxu0 0
        %766 = vmatmul.mubr.bf16.gmra.mrb[0].mxu0 %v569
        %v767 = vpop.f32.mrb[0].mxu0
        %v768 = vadd.f32 0.0, %v767
        %v769 = vpop.f32.mrb[0].mxu0
        %v770 = vpop.f32.mrb[0].mxu0
        %v771 = vadd.f32 0.0, %v770
        %v772 = vpop.f32.mrb[0].mxu0
        %773 = vmatprep.mubr.bf16.mxu0 0
        %774 = vmatmul.mubr.bf16.gmra.mrb[0].mxu0 %v570
        %v775 = vpop.f32.mrb[0].mxu0
        %v776 = vadd.f32 0.0, %v775
        %v777 = vpop.f32.mrb[0].mxu0
        %v778 = vpop.f32.mrb[0].mxu0
        %v779 = vadd.f32 0.0, %v778
        %v780 = vpop.f32.mrb[0].mxu0
        %781 = vmatprep.mubr.bf16.mxu0 0
        %782 = vmatmul.mubr.bf16.gmra.mrb[0].mxu0 %v571
        %v783 = vpop.f32.mrb[0].mxu0
        %v784 = vadd.f32 0.0, %v783
        %v785 = vpop.f32.mrb[0].mxu0
        %v786 = vpop.f32.mrb[0].mxu0
        %v787 = vadd.f32 0.0, %v786
        %v788 = vpop.f32.mrb[0].mxu0
        %789 = vmatprep.mubr.bf16.mxu0 0
        %790 = vmatmul.mubr.bf16.gmra.mrb[0].mxu0 %v572
        %v791 = vpop.f32.mrb[0].mxu0
        %v792 = vadd.f32 0.0, %v791
        %v793 = vpop.f32.mrb[0].mxu0
        %v794 = vpop.f32.mrb[0].mxu0
        %v795 = vadd.f32 0.0, %v794
        %v796 = vpop.f32.mrb[0].mxu0
        %797 = vdwg.mxu0
        %v798 = vpack.c.bf16 %v675, %v672
        %v799 = vpack.c.bf16 %v683, %v680
        %v800 = vpack.c.bf16 %v691, %v688
        %v801 = vpack.c.bf16 %v699, %v696
        %v802 = vpack.c.bf16 %v707, %v704
        %v803 = vpack.c.bf16 %v715, %v712
        %v804 = vpack.c.bf16 %v723, %v720
        %v805 = vpack.c.bf16 %v731, %v728
        %v806 = vpack.c.bf16 %v739, %v736
        %v807 = vpack.c.bf16 %v747, %v744
        %v808 = vpack.c.bf16 %v755, %v752
        %v809 = vpack.c.bf16 %v763, %v760
        %v810 = vpack.c.bf16 %v771, %v768
        %v811 = vpack.c.bf16 %v779, %v776
        %v812 = vpack.c.bf16 %v787, %v784
        %v813 = vpack.c.bf16 %v795, %v792
        %v830 = vunpack.c.l.b16 %v413
        %v831 = vunpack.c.l.b16 %v414
        %v832 = vunpack.c.l.b16 %v415
        %v833 = vunpack.c.l.b16 %v416
        %v834 = vunpack.c.l.b16 %v417
        %v835 = vunpack.c.l.b16 %v418
        %v836 = vunpack.c.l.b16 %v419
        %v837 = vunpack.c.l.b16 %v420
        %v838 = vunpack.c.l.b16 %v421
        %v839 = vunpack.c.l.b16 %v422
        %v840 = vunpack.c.l.b16 %v423
        %v841 = vunpack.c.l.b16 %v424
        %v842 = vunpack.c.l.b16 %v425
        %v843 = vunpack.c.l.b16 %v426
        %v844 = vunpack.c.l.b16 %v427
        %v845 = vunpack.c.l.b16 %v428
        %v846 = vpack.c.b16 %v831, %v830
        %v847 = vpack.c.b16 %v833, %v832
        %v848 = vpack.c.b16 %v835, %v834
        %v849 = vpack.c.b16 %v837, %v836
        %v850 = vpack.c.b16 %v839, %v838
        %v851 = vpack.c.b16 %v841, %v840
        %v852 = vpack.c.b16 %v843, %v842
        %v853 = vpack.c.b16 %v845, %v844
        %862 = vmatprep.subr.bf16.mxu0 0
        %863 = vmatpush1.bf16.msra.mxu0 %v798
        %864 = vmatprep.subr.bf16.mxu0 0
        %865 = vmatpush1.bf16.msra.mxu0 %v799
        %866 = vmatprep.subr.bf16.mxu0 0
        %867 = vmatpush1.bf16.msra.mxu0 %v800
        %868 = vmatprep.subr.bf16.mxu0 0
        %869 = vmatpush1.bf16.msra.mxu0 %v801
        %870 = vmatprep.subr.bf16.mxu0 0
        %871 = vmatpush1.bf16.msra.mxu0 %v802
        %872 = vmatprep.subr.bf16.mxu0 0
        %873 = vmatpush1.bf16.msra.mxu0 %v803
        %874 = vmatprep.subr.bf16.mxu0 0
        %875 = vmatpush1.bf16.msra.mxu0 %v804
        %876 = vmatprep.subr.bf16.mxu0 0
        %877 = vmatpush1.bf16.msra.mxu0 %v805
        %878 = vmatprep.subr.bf16.mxu0 0
        %879 = vmatpush1.bf16.msra.mxu0 0
        %880 = vmatprep.subr.bf16.mxu0 0
        %881 = vmatpush1.bf16.msra.mxu0 0
        %882 = vmatprep.subr.bf16.mxu0 0
        %883 = vmatpush1.bf16.msra.mxu0 0
        %884 = vmatprep.subr.bf16.mxu0 0
        %885 = vmatpush1.bf16.msra.mxu0 0
        %886 = vmatprep.subr.bf16.mxu0 0
        %887 = vmatpush1.bf16.msra.mxu0 0
        %888 = vmatprep.subr.bf16.mxu0 0
        %889 = vmatpush1.bf16.msra.mxu0 0
        %890 = vmatprep.subr.bf16.mxu0 0
        %891 = vmatpush1.bf16.msra.mxu0 0
        %892 = vmatprep.subr.bf16.mxu0 0
        %893 = vmatpush1.bf16.msra.mxu0 0
        %894 = vmatprep.mubr.bf16.mxu0 0
        %895 = vmatmul.mubr.bf16.gmra.mrb[0].mxu0 %v846
        %v896 = vpop.f32.mrb[0].mxu0
        %v897 = vadd.f32 0.0, %v896
        %v898 = vpop.f32.mrb[0].mxu0
        %v899 = vpop.f32.mrb[0].mxu0
        %v900 = vadd.f32 0.0, %v899
        %v901 = vpop.f32.mrb[0].mxu0
        %902 = vmatprep.mubr.bf16.mxu0 0
        %903 = vmatmul.mubr.bf16.gmra.mrb[0].mxu0 %v847
        %v904 = vpop.f32.mrb[0].mxu0
        %v905 = vadd.f32 0.0, %v904
        %v906 = vpop.f32.mrb[0].mxu0
        %v907 = vpop.f32.mrb[0].mxu0
        %v908 = vadd.f32 0.0, %v907
        %v909 = vpop.f32.mrb[0].mxu0
        %910 = vmatprep.mubr.bf16.mxu0 0
        %911 = vmatmul.mubr.bf16.gmra.mrb[0].mxu0 %v848
        %v912 = vpop.f32.mrb[0].mxu0
        %v913 = vadd.f32 0.0, %v912
        %v914 = vpop.f32.mrb[0].mxu0
        %v915 = vpop.f32.mrb[0].mxu0
        %v916 = vadd.f32 0.0, %v915
        %v917 = vpop.f32.mrb[0].mxu0
        %918 = vmatprep.mubr.bf16.mxu0 0
        %919 = vmatmul.mubr.bf16.gmra.mrb[0].mxu0 %v849
        %v920 = vpop.f32.mrb[0].mxu0
        %v921 = vadd.f32 0.0, %v920
        %v922 = vpop.f32.mrb[0].mxu0
        %v923 = vpop.f32.mrb[0].mxu0
        %v924 = vadd.f32 0.0, %v923
        %v925 = vpop.f32.mrb[0].mxu0
        %926 = vmatprep.mubr.bf16.mxu0 0
        %927 = vmatmul.mubr.bf16.gmra.mrb[0].mxu0 %v850
        %v928 = vpop.f32.mrb[0].mxu0
        %v929 = vadd.f32 0.0, %v928
        %v930 = vpop.f32.mrb[0].mxu0
        %v931 = vpop.f32.mrb[0].mxu0
        %v932 = vadd.f32 0.0, %v931
        %v933 = vpop.f32.mrb[0].mxu0
        %934 = vmatprep.mubr.bf16.mxu0 0
        %935 = vmatmul.mubr.bf16.gmra.mrb[0].mxu0 %v851
        %v936 = vpop.f32.mrb[0].mxu0
        %v937 = vadd.f32 0.0, %v936
        %v938 = vpop.f32.mrb[0].mxu0
        %v939 = vpop.f32.mrb[0].mxu0
        %v940 = vadd.f32 0.0, %v939
        %v941 = vpop.f32.mrb[0].mxu0
        %942 = vmatprep.mubr.bf16.mxu0 0
        %943 = vmatmul.mubr.bf16.gmra.mrb[0].mxu0 %v852
        %v944 = vpop.f32.mrb[0].mxu0
        %v945 = vadd.f32 0.0, %v944
        %v946 = vpop.f32.mrb[0].mxu0
        %v947 = vpop.f32.mrb[0].mxu0
        %v948 = vadd.f32 0.0, %v947
        %v949 = vpop.f32.mrb[0].mxu0
        %950 = vmatprep.mubr.bf16.mxu0 0
        %951 = vmatmul.mubr.bf16.gmra.mrb[0].mxu0 %v853
        %v952 = vpop.f32.mrb[0].mxu0
        %v953 = vadd.f32 0.0, %v952
        %v954 = vpop.f32.mrb[0].mxu0
        %v955 = vpop.f32.mrb[0].mxu0
        %v956 = vadd.f32 0.0, %v955
        %v957 = vpop.f32.mrb[0].mxu0
        %958 = vdwg.mxu0
        %v975 = vunpack.c.l.b16 %v429
        %v976 = vunpack.c.l.b16 %v430
        %v977 = vunpack.c.l.b16 %v431
        %v978 = vunpack.c.l.b16 %v432
        %v979 = vunpack.c.l.b16 %v433
        %v980 = vunpack.c.l.b16 %v434
        %v981 = vunpack.c.l.b16 %v435
        %v982 = vunpack.c.l.b16 %v436
        %v983 = vunpack.c.l.b16 %v437
        %v984 = vunpack.c.l.b16 %v438
        %v985 = vunpack.c.l.b16 %v439
        %v986 = vunpack.c.l.b16 %v440
        %v987 = vunpack.c.l.b16 %v441
        %v988 = vunpack.c.l.b16 %v442
        %v989 = vunpack.c.l.b16 %v443
        %v990 = vunpack.c.l.b16 %v444
        %v991 = vpack.c.b16 %v976, %v975
        %v992 = vpack.c.b16 %v978, %v977
        %v993 = vpack.c.b16 %v980, %v979
        %v994 = vpack.c.b16 %v982, %v981
        %v995 = vpack.c.b16 %v984, %v983
        %v996 = vpack.c.b16 %v986, %v985
        %v997 = vpack.c.b16 %v988, %v987
        %v998 = vpack.c.b16 %v990, %v989
        %1007 = vmatprep.subr.bf16.mxu0 0
        %1008 = vmatpush1.bf16.msra.mxu0 %v806
        %1009 = vmatprep.subr.bf16.mxu0 0
        %1010 = vmatpush1.bf16.msra.mxu0 %v807
        %1011 = vmatprep.subr.bf16.mxu0 0
        %1012 = vmatpush1.bf16.msra.mxu0 %v808
        %1013 = vmatprep.subr.bf16.mxu0 0
        %1014 = vmatpush1.bf16.msra.mxu0 %v809
        %1015 = vmatprep.subr.bf16.mxu0 0
        %1016 = vmatpush1.bf16.msra.mxu0 %v810
        %1017 = vmatprep.subr.bf16.mxu0 0
        %1018 = vmatpush1.bf16.msra.mxu0 %v811
        %1019 = vmatprep.subr.bf16.mxu0 0
        %1020 = vmatpush1.bf16.msra.mxu0 %v812
        %1021 = vmatprep.subr.bf16.mxu0 0
        %1022 = vmatpush1.bf16.msra.mxu0 %v813
        %1023 = vmatprep.subr.bf16.mxu0 0
        %1024 = vmatpush1.bf16.msra.mxu0 0
        %1025 = vmatprep.subr.bf16.mxu0 0
        %1026 = vmatpush1.bf16.msra.mxu0 0
        %1027 = vmatprep.subr.bf16.mxu0 0
        %1028 = vmatpush1.bf16.msra.mxu0 0
        %1029 = vmatprep.subr.bf16.mxu0 0
        %1030 = vmatpush1.bf16.msra.mxu0 0
        %1031 = vmatprep.subr.bf16.mxu0 0
        %1032 = vmatpush1.bf16.msra.mxu0 0
        %1033 = vmatprep.subr.bf16.mxu0 0
        %1034 = vmatpush1.bf16.msra.mxu0 0
        %1035 = vmatprep.subr.bf16.mxu0 0
        %1036 = vmatpush1.bf16.msra.mxu0 0
        %1037 = vmatprep.subr.bf16.mxu0 0
        %1038 = vmatpush1.bf16.msra.mxu0 0
        %1039 = vmatprep.mubr.bf16.mxu0 0
        %1040 = vmatmul.mubr.bf16.gmra.mrb[0].mxu0 %v991
        %v1041 = vpop.f32.mrb[0].mxu0
        %v1042 = vadd.f32 0.0, %v1041
        %v1043 = vpop.f32.mrb[0].mxu0
        %v1044 = vpop.f32.mrb[0].mxu0
        %v1045 = vadd.f32 0.0, %v1044
        %v1046 = vpop.f32.mrb[0].mxu0
        %1047 = vmatprep.mubr.bf16.mxu0 0
        %1048 = vmatmul.mubr.bf16.gmra.mrb[0].mxu0 %v992
        %v1049 = vpop.f32.mrb[0].mxu0
        %v1050 = vadd.f32 0.0, %v1049
        %v1051 = vpop.f32.mrb[0].mxu0
        %v1052 = vpop.f32.mrb[0].mxu0
        %v1053 = vadd.f32 0.0, %v1052
        %v1054 = vpop.f32.mrb[0].mxu0
        %1055 = vmatprep.mubr.bf16.mxu0 0
        %1056 = vmatmul.mubr.bf16.gmra.mrb[0].mxu0 %v993
        %v1057 = vpop.f32.mrb[0].mxu0
        %v1058 = vadd.f32 0.0, %v1057
        %v1059 = vpop.f32.mrb[0].mxu0
        %v1060 = vpop.f32.mrb[0].mxu0
        %v1061 = vadd.f32 0.0, %v1060
        %v1062 = vpop.f32.mrb[0].mxu0
        %1063 = vmatprep.mubr.bf16.mxu0 0
        %1064 = vmatmul.mubr.bf16.gmra.mrb[0].mxu0 %v994
        %v1065 = vpop.f32.mrb[0].mxu0
        %v1066 = vadd.f32 0.0, %v1065
        %v1067 = vpop.f32.mrb[0].mxu0
        %v1068 = vpop.f32.mrb[0].mxu0
        %v1069 = vadd.f32 0.0, %v1068
        %v1070 = vpop.f32.mrb[0].mxu0
        %1071 = vmatprep.mubr.bf16.mxu0 0
        %1072 = vmatmul.mubr.bf16.gmra.mrb[0].mxu0 %v995
        %v1073 = vpop.f32.mrb[0].mxu0
        %v1074 = vadd.f32 0.0, %v1073
        %v1075 = vpop.f32.mrb[0].mxu0
        %v1076 = vpop.f32.mrb[0].mxu0
        %v1077 = vadd.f32 0.0, %v1076
        %v1078 = vpop.f32.mrb[0].mxu0
        %1079 = vmatprep.mubr.bf16.mxu0 0
        %1080 = vmatmul.mubr.bf16.gmra.mrb[0].mxu0 %v996
        %v1081 = vpop.f32.mrb[0].mxu0
        %v1082 = vadd.f32 0.0, %v1081
        %v1083 = vpop.f32.mrb[0].mxu0
        %v1084 = vpop.f32.mrb[0].mxu0
        %v1085 = vadd.f32 0.0, %v1084
        %v1086 = vpop.f32.mrb[0].mxu0
        %1087 = vmatprep.mubr.bf16.mxu0 0
        %1088 = vmatmul.mubr.bf16.gmra.mrb[0].mxu0 %v997
        %v1089 = vpop.f32.mrb[0].mxu0
        %v1090 = vadd.f32 0.0, %v1089
        %v1091 = vpop.f32.mrb[0].mxu0
        %v1092 = vpop.f32.mrb[0].mxu0
        %v1093 = vadd.f32 0.0, %v1092
        %v1094 = vpop.f32.mrb[0].mxu0
        %1095 = vmatprep.mubr.bf16.mxu0 0
        %1096 = vmatmul.mubr.bf16.gmra.mrb[0].mxu0 %v998
        %v1097 = vpop.f32.mrb[0].mxu0
        %v1098 = vadd.f32 0.0, %v1097
        %v1099 = vpop.f32.mrb[0].mxu0
        %v1100 = vpop.f32.mrb[0].mxu0
        %v1101 = vadd.f32 0.0, %v1100
        %v1102 = vpop.f32.mrb[0].mxu0
        %1103 = vdwg.mxu0
        %v1104 = vld [vmem:[%s3] sm:$0x1]
        %v1106 = vlaneseq
        %v1107 = vshrl.u32 %v1106, 7
        %v1108 = vsub.s32 0, %v1107
        %v1109 = vrot.slane %v1104, %v1108
        %v1111 = vadd.f32 %v897, %v1109
        %v1112 = vadd.f32 %v900, %v1109
        %v1113 = vadd.f32 %v905, %v1109
        %v1114 = vadd.f32 %v908, %v1109
        %v1115 = vadd.f32 %v913, %v1109
        %v1116 = vadd.f32 %v916, %v1109
        %v1117 = vadd.f32 %v921, %v1109
        %v1118 = vadd.f32 %v924, %v1109
        %v1119 = vadd.f32 %v929, %v1109
        %v1120 = vadd.f32 %v932, %v1109
        %v1121 = vadd.f32 %v937, %v1109
        %v1122 = vadd.f32 %v940, %v1109
        %v1123 = vadd.f32 %v945, %v1109
        %v1124 = vadd.f32 %v948, %v1109
        %v1125 = vadd.f32 %v953, %v1109
        %v1126 = vadd.f32 %v956, %v1109
        %v1127 = vadd.f32 %v1042, %v1109
        %v1128 = vadd.f32 %v1045, %v1109
        %v1129 = vadd.f32 %v1050, %v1109
        %v1130 = vadd.f32 %v1053, %v1109
        %v1131 = vadd.f32 %v1058, %v1109
        %v1132 = vadd.f32 %v1061, %v1109
        %v1133 = vadd.f32 %v1066, %v1109
        %v1134 = vadd.f32 %v1069, %v1109
        %v1135 = vadd.f32 %v1074, %v1109
        %v1136 = vadd.f32 %v1077, %v1109
        %v1137 = vadd.f32 %v1082, %v1109
        %v1138 = vadd.f32 %v1085, %v1109
        %v1139 = vadd.f32 %v1090, %v1109
        %v1140 = vadd.f32 %v1093, %v1109
        %v1141 = vadd.f32 %v1098, %v1109
        %v1142 = vadd.f32 %v1101, %v1109
        %v1143 = vmax.f32 %v1111, 0.0
        %v1144 = vmax.f32 %v1112, 0.0
        %v1145 = vmax.f32 %v1113, 0.0
        %v1146 = vmax.f32 %v1114, 0.0
        %v1147 = vmax.f32 %v1115, 0.0
        %v1148 = vmax.f32 %v1116, 0.0
        %v1149 = vmax.f32 %v1117, 0.0
        %v1150 = vmax.f32 %v1118, 0.0
        %v1151 = vmax.f32 %v1119, 0.0
        %v1152 = vmax.f32 %v1120, 0.0
        %v1153 = vmax.f32 %v1121, 0.0
        %v1154 = vmax.f32 %v1122, 0.0
        %v1155 = vmax.f32 %v1123, 0.0
        %v1156 = vmax.f32 %v1124, 0.0
        %v1157 = vmax.f32 %v1125, 0.0
        %v1158 = vmax.f32 %v1126, 0.0
        %v1159 = vmax.f32 %v1127, 0.0
        %v1160 = vmax.f32 %v1128, 0.0
        %v1161 = vmax.f32 %v1129, 0.0
        %v1162 = vmax.f32 %v1130, 0.0
        %v1163 = vmax.f32 %v1131, 0.0
        %v1164 = vmax.f32 %v1132, 0.0
        %v1165 = vmax.f32 %v1133, 0.0
        %v1166 = vmax.f32 %v1134, 0.0
        %v1167 = vmax.f32 %v1135, 0.0
        %v1168 = vmax.f32 %v1136, 0.0
        %v1169 = vmax.f32 %v1137, 0.0
        %v1170 = vmax.f32 %v1138, 0.0
        %v1171 = vmax.f32 %v1139, 0.0
        %v1172 = vmax.f32 %v1140, 0.0
        %v1173 = vmax.f32 %v1141, 0.0
        %v1174 = vmax.f32 %v1142, 0.0
        %v1175 = vpack.c.bf16 %v1144, %v1143
        %v1176 = vpack.c.bf16 %v1146, %v1145
        %v1177 = vpack.c.bf16 %v1148, %v1147
        %v1178 = vpack.c.bf16 %v1150, %v1149
        %v1179 = vpack.c.bf16 %v1152, %v1151
        %v1180 = vpack.c.bf16 %v1154, %v1153
        %v1181 = vpack.c.bf16 %v1156, %v1155
        %v1182 = vpack.c.bf16 %v1158, %v1157
        %v1183 = vpack.c.bf16 %v1160, %v1159
        %v1184 = vpack.c.bf16 %v1162, %v1161
        %v1185 = vpack.c.bf16 %v1164, %v1163
        %v1186 = vpack.c.bf16 %v1166, %v1165
        %v1187 = vpack.c.bf16 %v1168, %v1167
        %v1188 = vpack.c.bf16 %v1170, %v1169
        %v1189 = vpack.c.bf16 %v1172, %v1171
        %v1190 = vpack.c.bf16 %v1174, %v1173
        %v1191 = vld [vmem:[#allocation8] sm:$0xf]
        %v1192 = vld [vmem:[#allocation8 + $0x4] sm:$0xf]
        %v1193 = vld [vmem:[#allocation8 + $0x8] sm:$0xf]
        %v1194 = vld [vmem:[#allocation8 + $0xc] sm:$0xf]
        %v1195 = vld [vmem:[#allocation8 + $0x10] sm:$0xf]
        %v1196 = vld [vmem:[#allocation8 + $0x14] sm:$0xf]
        %v1197 = vld [vmem:[#allocation8 + $0x18] sm:$0xf]
        %v1198 = vld [vmem:[#allocation8 + $0x1c] sm:$0xf]
        %v1199 = vld [vmem:[#allocation8 + $0x20] sm:$0xf]
        %v1200 = vld [vmem:[#allocation8 + $0x24] sm:$0xf]
        %v1201 = vld [vmem:[#allocation8 + $0x28] sm:$0xf]
        %v1202 = vld [vmem:[#allocation8 + $0x2c] sm:$0xf]
        %v1203 = vld [vmem:[#allocation8 + $0x30] sm:$0xf]
        %v1204 = vld [vmem:[#allocation8 + $0x34] sm:$0xf]
        %v1205 = vld [vmem:[#allocation8 + $0x38] sm:$0xf]
        %v1206 = vld [vmem:[#allocation8 + $0x3c] sm:$0xf]
        %v1223 = vunpack.c.l.b16 %v1191
        %v1224 = vunpack.c.l.b16 %v1192
        %v1225 = vunpack.c.l.b16 %v1193
        %v1226 = vunpack.c.l.b16 %v1194
        %v1227 = vunpack.c.l.b16 %v1195
        %v1228 = vunpack.c.l.b16 %v1196
        %v1229 = vunpack.c.l.b16 %v1197
        %v1230 = vunpack.c.l.b16 %v1198
        %v1231 = vunpack.c.l.b16 %v1199
        %v1232 = vunpack.c.l.b16 %v1200
        %v1233 = vunpack.c.l.b16 %v1201
        %v1234 = vunpack.c.l.b16 %v1202
        %v1235 = vunpack.c.l.b16 %v1203
        %v1236 = vunpack.c.l.b16 %v1204
        %v1237 = vunpack.c.l.b16 %v1205
        %v1238 = vunpack.c.l.b16 %v1206
        %v1239 = vpack.c.b16 %v1224, %v1223
        %v1240 = vpack.c.b16 %v1226, %v1225
        %v1241 = vpack.c.b16 %v1228, %v1227
        %v1242 = vpack.c.b16 %v1230, %v1229
        %v1243 = vpack.c.b16 %v1232, %v1231
        %v1244 = vpack.c.b16 %v1234, %v1233
        %v1245 = vpack.c.b16 %v1236, %v1235
        %v1246 = vpack.c.b16 %v1238, %v1237
        %1255 = vmatprep.subr.bf16.mxu0 0
        %1256 = vmatpush1.bf16.msra.mxu0 %v1239
        %1257 = vmatprep.subr.bf16.mxu0 0
        %1258 = vmatpush1.bf16.msra.mxu0 %v1240
        %1259 = vmatprep.subr.bf16.mxu0 0
        %1260 = vmatpush1.bf16.msra.mxu0 %v1241
        %1261 = vmatprep.subr.bf16.mxu0 0
        %1262 = vmatpush1.bf16.msra.mxu0 %v1242
        %1263 = vmatprep.subr.bf16.mxu0 0
        %1264 = vmatpush1.bf16.msra.mxu0 %v1243
        %1265 = vmatprep.subr.bf16.mxu0 0
        %1266 = vmatpush1.bf16.msra.mxu0 %v1244
        %1267 = vmatprep.subr.bf16.mxu0 0
        %1268 = vmatpush1.bf16.msra.mxu0 %v1245
        %1269 = vmatprep.subr.bf16.mxu0 0
        %1270 = vmatpush1.bf16.msra.mxu0 %v1246
        %1271 = vmatprep.subr.bf16.mxu0 0
        %1272 = vmatpush1.bf16.msra.mxu0 0
        %1273 = vmatprep.subr.bf16.mxu0 0
        %1274 = vmatpush1.bf16.msra.mxu0 0
        %1275 = vmatprep.subr.bf16.mxu0 0
        %1276 = vmatpush1.bf16.msra.mxu0 0
        %1277 = vmatprep.subr.bf16.mxu0 0
        %1278 = vmatpush1.bf16.msra.mxu0 0
        %1279 = vmatprep.subr.bf16.mxu0 0
        %1280 = vmatpush1.bf16.msra.mxu0 0
        %1281 = vmatprep.subr.bf16.mxu0 0
        %1282 = vmatpush1.bf16.msra.mxu0 0
        %1283 = vmatprep.subr.bf16.mxu0 0
        %1284 = vmatpush1.bf16.msra.mxu0 0
        %1285 = vmatprep.subr.bf16.mxu0 0
        %1286 = vmatpush1.bf16.msra.mxu0 0
        %1287 = vmatprep.mubr.bf16.mxu0 0
        %1288 = vmatmul.mubr.bf16.gmra.mrb[0].mxu0 %v1175
        %v1289 = vpop.f32.mrb[0].mxu0
        %v1290 = vadd.f32 0.0, %v1289
        %v1291 = vpop.f32.mrb[0].mxu0
        %v1292 = vpop.f32.mrb[0].mxu0
        %v1293 = vadd.f32 0.0, %v1292
        %v1294 = vpop.f32.mrb[0].mxu0
        %1295 = vmatprep.mubr.bf16.mxu0 0
        %1296 = vmatmul.mubr.bf16.gmra.mrb[0].mxu0 %v1176
        %v1297 = vpop.f32.mrb[0].mxu0
        %v1298 = vadd.f32 0.0, %v1297
        %v1299 = vpop.f32.mrb[0].mxu0
        %v1300 = vpop.f32.mrb[0].mxu0
        %v1301 = vadd.f32 0.0, %v1300
        %v1302 = vpop.f32.mrb[0].mxu0
        %1303 = vmatprep.mubr.bf16.mxu0 0
        %1304 = vmatmul.mubr.bf16.gmra.mrb[0].mxu0 %v1177
        %v1305 = vpop.f32.mrb[0].mxu0
        %v1306 = vadd.f32 0.0, %v1305
        %v1307 = vpop.f32.mrb[0].mxu0
        %v1308 = vpop.f32.mrb[0].mxu0
        %v1309 = vadd.f32 0.0, %v1308
        %v1310 = vpop.f32.mrb[0].mxu0
        %1311 = vmatprep.mubr.bf16.mxu0 0
        %1312 = vmatmul.mubr.bf16.gmra.mrb[0].mxu0 %v1178
        %v1313 = vpop.f32.mrb[0].mxu0
        %v1314 = vadd.f32 0.0, %v1313
        %v1315 = vpop.f32.mrb[0].mxu0
        %v1316 = vpop.f32.mrb[0].mxu0
        %v1317 = vadd.f32 0.0, %v1316
        %v1318 = vpop.f32.mrb[0].mxu0
        %1319 = vmatprep.mubr.bf16.mxu0 0
        %1320 = vmatmul.mubr.bf16.gmra.mrb[0].mxu0 %v1179
        %v1321 = vpop.f32.mrb[0].mxu0
        %v1322 = vadd.f32 0.0, %v1321
        %v1323 = vpop.f32.mrb[0].mxu0
        %v1324 = vpop.f32.mrb[0].mxu0
        %v1325 = vadd.f32 0.0, %v1324
        %v1326 = vpop.f32.mrb[0].mxu0
        %1327 = vmatprep.mubr.bf16.mxu0 0
        %1328 = vmatmul.mubr.bf16.gmra.mrb[0].mxu0 %v1180
        %v1329 = vpop.f32.mrb[0].mxu0
        %v1330 = vadd.f32 0.0, %v1329
        %v1331 = vpop.f32.mrb[0].mxu0
        %v1332 = vpop.f32.mrb[0].mxu0
        %v1333 = vadd.f32 0.0, %v1332
        %v1334 = vpop.f32.mrb[0].mxu0
        %1335 = vmatprep.mubr.bf16.mxu0 0
        %1336 = vmatmul.mubr.bf16.gmra.mrb[0].mxu0 %v1181
        %v1337 = vpop.f32.mrb[0].mxu0
        %v1338 = vadd.f32 0.0, %v1337
        %v1339 = vpop.f32.mrb[0].mxu0
        %v1340 = vpop.f32.mrb[0].mxu0
        %v1341 = vadd.f32 0.0, %v1340
        %v1342 = vpop.f32.mrb[0].mxu0
        %1343 = vmatprep.mubr.bf16.mxu0 0
        %1344 = vmatmul.mubr.bf16.gmra.mrb[0].mxu0 %v1182
        %v1345 = vpop.f32.mrb[0].mxu0
        %v1346 = vadd.f32 0.0, %v1345
        %v1347 = vpop.f32.mrb[0].mxu0
        %v1348 = vpop.f32.mrb[0].mxu0
        %v1349 = vadd.f32 0.0, %v1348
        %v1350 = vpop.f32.mrb[0].mxu0
        %1351 = vmatprep.mubr.bf16.mxu0 0
        %1352 = vmatmul.mubr.bf16.gmra.mrb[0].mxu0 %v1183
        %v1353 = vpop.f32.mrb[0].mxu0
        %v1354 = vadd.f32 0.0, %v1353
        %v1355 = vpop.f32.mrb[0].mxu0
        %v1356 = vpop.f32.mrb[0].mxu0
        %v1357 = vadd.f32 0.0, %v1356
        %v1358 = vpop.f32.mrb[0].mxu0
        %1359 = vmatprep.mubr.bf16.mxu0 0
        %1360 = vmatmul.mubr.bf16.gmra.mrb[0].mxu0 %v1184
        %v1361 = vpop.f32.mrb[0].mxu0
        %v1362 = vadd.f32 0.0, %v1361
        %v1363 = vpop.f32.mrb[0].mxu0
        %v1364 = vpop.f32.mrb[0].mxu0
        %v1365 = vadd.f32 0.0, %v1364
        %v1366 = vpop.f32.mrb[0].mxu0
        %1367 = vmatprep.mubr.bf16.mxu0 0
        %1368 = vmatmul.mubr.bf16.gmra.mrb[0].mxu0 %v1185
        %v1369 = vpop.f32.mrb[0].mxu0
        %v1370 = vadd.f32 0.0, %v1369
        %v1371 = vpop.f32.mrb[0].mxu0
        %v1372 = vpop.f32.mrb[0].mxu0
        %v1373 = vadd.f32 0.0, %v1372
        %v1374 = vpop.f32.mrb[0].mxu0
        %1375 = vmatprep.mubr.bf16.mxu0 0
        %1376 = vmatmul.mubr.bf16.gmra.mrb[0].mxu0 %v1186
        %v1377 = vpop.f32.mrb[0].mxu0
        %v1378 = vadd.f32 0.0, %v1377
        %v1379 = vpop.f32.mrb[0].mxu0
        %v1380 = vpop.f32.mrb[0].mxu0
        %v1381 = vadd.f32 0.0, %v1380
        %v1382 = vpop.f32.mrb[0].mxu0
        %1383 = vmatprep.mubr.bf16.mxu0 0
        %1384 = vmatmul.mubr.bf16.gmra.mrb[0].mxu0 %v1187
        %v1385 = vpop.f32.mrb[0].mxu0
        %v1386 = vadd.f32 0.0, %v1385
        %v1387 = vpop.f32.mrb[0].mxu0
        %v1388 = vpop.f32.mrb[0].mxu0
        %v1389 = vadd.f32 0.0, %v1388
        %v1390 = vpop.f32.mrb[0].mxu0
        %1391 = vmatprep.mubr.bf16.mxu0 0
        %1392 = vmatmul.mubr.bf16.gmra.mrb[0].mxu0 %v1188
        %v1393 = vpop.f32.mrb[0].mxu0
        %v1394 = vadd.f32 0.0, %v1393
        %v1395 = vpop.f32.mrb[0].mxu0
        %v1396 = vpop.f32.mrb[0].mxu0
        %v1397 = vadd.f32 0.0, %v1396
        %v1398 = vpop.f32.mrb[0].mxu0
        %1399 = vmatprep.mubr.bf16.mxu0 0
        %1400 = vmatmul.mubr.bf16.gmra.mrb[0].mxu0 %v1189
        %v1401 = vpop.f32.mrb[0].mxu0
        %v1402 = vadd.f32 0.0, %v1401
        %v1403 = vpop.f32.mrb[0].mxu0
        %v1404 = vpop.f32.mrb[0].mxu0
        %v1405 = vadd.f32 0.0, %v1404
        %v1406 = vpop.f32.mrb[0].mxu0
        %1407 = vmatprep.mubr.bf16.mxu0 0
        %1408 = vmatmul.mubr.bf16.gmra.mrb[0].mxu0 %v1190
        %v1409 = vpop.f32.mrb[0].mxu0
        %v1410 = vadd.f32 0.0, %v1409
        %v1411 = vpop.f32.mrb[0].mxu0
        %v1412 = vpop.f32.mrb[0].mxu0
        %v1413 = vadd.f32 0.0, %v1412
        %v1414 = vpop.f32.mrb[0].mxu0
        %1415 = vdwg.mxu0
        %v1416 = vpack.c.bf16 %v1293, %v1290
        %v1417 = vpack.c.bf16 %v1301, %v1298
        %v1418 = vpack.c.bf16 %v1309, %v1306
        %v1419 = vpack.c.bf16 %v1317, %v1314
        %v1420 = vpack.c.bf16 %v1325, %v1322
        %v1421 = vpack.c.bf16 %v1333, %v1330
        %v1422 = vpack.c.bf16 %v1341, %v1338
        %v1423 = vpack.c.bf16 %v1349, %v1346
        %v1424 = vpack.c.bf16 %v1357, %v1354
        %v1425 = vpack.c.bf16 %v1365, %v1362
        %v1426 = vpack.c.bf16 %v1373, %v1370
        %v1427 = vpack.c.bf16 %v1381, %v1378
        %v1428 = vpack.c.bf16 %v1389, %v1386
        %v1429 = vpack.c.bf16 %v1397, %v1394
        %v1430 = vpack.c.bf16 %v1405, %v1402
        %v1431 = vpack.c.bf16 %v1413, %v1410
        %1432 = vmatprep.subr.bf16.mxu0 0
        %1433 = vmatpush1.bf16.msra.mxu0 %v1416
        %1434 = vmatprep.subr.bf16.mxu0 0
        %1435 = vmatpush1.bf16.msra.mxu0 %v1417
        %1436 = vmatprep.subr.bf16.mxu0 0
        %1437 = vmatpush1.bf16.msra.mxu0 %v1418
        %1438 = vmatprep.subr.bf16.mxu0 0
        %1439 = vmatpush1.bf16.msra.mxu0 %v1419
        %1440 = vmatprep.subr.bf16.mxu0 0
        %1441 = vmatpush1.bf16.msra.mxu0 %v1420
        %1442 = vmatprep.subr.bf16.mxu0 0
        %1443 = vmatpush1.bf16.msra.mxu0 %v1421
        %1444 = vmatprep.subr.bf16.mxu0 0
        %1445 = vmatpush1.bf16.msra.mxu0 %v1422
        %1446 = vmatprep.subr.bf16.mxu0 0
        %1447 = vmatpush1.bf16.msra.mxu0 %v1423
        %1448 = vmatprep.subr.bf16.mxu0 0
        %1449 = vmatpush1.bf16.msra.mxu0 0
        %1450 = vmatprep.subr.bf16.mxu0 0
        %1451 = vmatpush1.bf16.msra.mxu0 0
        %1452 = vmatprep.subr.bf16.mxu0 0
        %1453 = vmatpush1.bf16.msra.mxu0 0
        %1454 = vmatprep.subr.bf16.mxu0 0
        %1455 = vmatpush1.bf16.msra.mxu0 0
        %1456 = vmatprep.subr.bf16.mxu0 0
        %1457 = vmatpush1.bf16.msra.mxu0 0
        %1458 = vmatprep.subr.bf16.mxu0 0
        %1459 = vmatpush1.bf16.msra.mxu0 0
        %1460 = vmatprep.subr.bf16.mxu0 0
        %1461 = vmatpush1.bf16.msra.mxu0 0
        %1462 = vmatprep.subr.bf16.mxu0 0
        %1463 = vmatpush1.bf16.msra.mxu0 0
        %1464 = vmatprep.mubr.bf16.mxu0 0
        %1465 = vmatmul.mubr.bf16.gmra.mrb[0].mxu0 %v846
        %v1466 = vpop.f32.mrb[0].mxu0
        %v1467 = vadd.f32 0.0, %v1466
        %v1468 = vpop.f32.mrb[0].mxu0
        %v1469 = vpop.f32.mrb[0].mxu0
        %v1470 = vadd.f32 0.0, %v1469
        %v1471 = vpop.f32.mrb[0].mxu0
        %1472 = vmatprep.mubr.bf16.mxu0 0
        %1473 = vmatmul.mubr.bf16.gmra.mrb[0].mxu0 %v847
        %v1474 = vpop.f32.mrb[0].mxu0
        %v1475 = vadd.f32 0.0, %v1474
        %v1476 = vpop.f32.mrb[0].mxu0
        %v1477 = vpop.f32.mrb[0].mxu0
        %v1478 = vadd.f32 0.0, %v1477
        %v1479 = vpop.f32.mrb[0].mxu0
        %1480 = vmatprep.mubr.bf16.mxu0 0
        %1481 = vmatmul.mubr.bf16.gmra.mrb[0].mxu0 %v848
        %v1482 = vpop.f32.mrb[0].mxu0
        %v1483 = vadd.f32 0.0, %v1482
        %v1484 = vpop.f32.mrb[0].mxu0
        %v1485 = vpop.f32.mrb[0].mxu0
        %v1486 = vadd.f32 0.0, %v1485
        %v1487 = vpop.f32.mrb[0].mxu0
        %1488 = vmatprep.mubr.bf16.mxu0 0
        %1489 = vmatmul.mubr.bf16.gmra.mrb[0].mxu0 %v849
        %v1490 = vpop.f32.mrb[0].mxu0
        %v1491 = vadd.f32 0.0, %v1490
        %v1492 = vpop.f32.mrb[0].mxu0
        %v1493 = vpop.f32.mrb[0].mxu0
        %v1494 = vadd.f32 0.0, %v1493
        %v1495 = vpop.f32.mrb[0].mxu0
        %1496 = vmatprep.mubr.bf16.mxu0 0
        %1497 = vmatmul.mubr.bf16.gmra.mrb[0].mxu0 %v850
        %v1498 = vpop.f32.mrb[0].mxu0
        %v1499 = vadd.f32 0.0, %v1498
        %v1500 = vpop.f32.mrb[0].mxu0
        %v1501 = vpop.f32.mrb[0].mxu0
        %v1502 = vadd.f32 0.0, %v1501
        %v1503 = vpop.f32.mrb[0].mxu0
        %1504 = vmatprep.mubr.bf16.mxu0 0
        %1505 = vmatmul.mubr.bf16.gmra.mrb[0].mxu0 %v851
        %v1506 = vpop.f32.mrb[0].mxu0
        %v1507 = vadd.f32 0.0, %v1506
        %v1508 = vpop.f32.mrb[0].mxu0
        %v1509 = vpop.f32.mrb[0].mxu0
        %v1510 = vadd.f32 0.0, %v1509
        %v1511 = vpop.f32.mrb[0].mxu0
        %1512 = vmatprep.mubr.bf16.mxu0 0
        %1513 = vmatmul.mubr.bf16.gmra.mrb[0].mxu0 %v852
        %v1514 = vpop.f32.mrb[0].mxu0
        %v1515 = vadd.f32 0.0, %v1514
        %v1516 = vpop.f32.mrb[0].mxu0
        %v1517 = vpop.f32.mrb[0].mxu0
        %v1518 = vadd.f32 0.0, %v1517
        %v1519 = vpop.f32.mrb[0].mxu0
        %1520 = vmatprep.mubr.bf16.mxu0 0
        %1521 = vmatmul.mubr.bf16.gmra.mrb[0].mxu0 %v853
        %v1522 = vpop.f32.mrb[0].mxu0
        %v1523 = vadd.f32 0.0, %v1522
        %v1524 = vpop.f32.mrb[0].mxu0
        %v1525 = vpop.f32.mrb[0].mxu0
        %v1526 = vadd.f32 0.0, %v1525
        %v1527 = vpop.f32.mrb[0].mxu0
        %1528 = vdwg.mxu0
        %1529 = vmatprep.subr.bf16.mxu0 0
        %1530 = vmatpush1.bf16.msra.mxu0 %v1424
        %1531 = vmatprep.subr.bf16.mxu0 0
        %1532 = vmatpush1.bf16.msra.mxu0 %v1425
        %1533 = vmatprep.subr.bf16.mxu0 0
        %1534 = vmatpush1.bf16.msra.mxu0 %v1426
        %1535 = vmatprep.subr.bf16.mxu0 0
        %1536 = vmatpush1.bf16.msra.mxu0 %v1427
        %1537 = vmatprep.subr.bf16.mxu0 0
        %1538 = vmatpush1.bf16.msra.mxu0 %v1428
        %1539 = vmatprep.subr.bf16.mxu0 0
        %1540 = vmatpush1.bf16.msra.mxu0 %v1429
        %1541 = vmatprep.subr.bf16.mxu0 0
        %1542 = vmatpush1.bf16.msra.mxu0 %v1430
        %1543 = vmatprep.subr.bf16.mxu0 0
        %1544 = vmatpush1.bf16.msra.mxu0 %v1431
        %1545 = vmatprep.subr.bf16.mxu0 0
        %1546 = vmatpush1.bf16.msra.mxu0 0
        %1547 = vmatprep.subr.bf16.mxu0 0
        %1548 = vmatpush1.bf16.msra.mxu0 0
        %1549 = vmatprep.subr.bf16.mxu0 0
        %1550 = vmatpush1.bf16.msra.mxu0 0
        %1551 = vmatprep.subr.bf16.mxu0 0
        %1552 = vmatpush1.bf16.msra.mxu0 0
        %1553 = vmatprep.subr.bf16.mxu0 0
        %1554 = vmatpush1.bf16.msra.mxu0 0
        %1555 = vmatprep.subr.bf16.mxu0 0
        %1556 = vmatpush1.bf16.msra.mxu0 0
        %1557 = vmatprep.subr.bf16.mxu0 0
        %1558 = vmatpush1.bf16.msra.mxu0 0
        %1559 = vmatprep.subr.bf16.mxu0 0
        %1560 = vmatpush1.bf16.msra.mxu0 0
        %1561 = vmatprep.mubr.bf16.mxu0 0
        %1562 = vmatmul.mubr.bf16.gmra.mrb[0].mxu0 %v991
        %v1563 = vpop.f32.mrb[0].mxu0
        %v1564 = vadd.f32 0.0, %v1563
        %v1565 = vpop.f32.mrb[0].mxu0
        %v1566 = vpop.f32.mrb[0].mxu0
        %v1567 = vadd.f32 0.0, %v1566
        %v1568 = vpop.f32.mrb[0].mxu0
        %1569 = vmatprep.mubr.bf16.mxu0 0
        %1570 = vmatmul.mubr.bf16.gmra.mrb[0].mxu0 %v992
        %v1571 = vpop.f32.mrb[0].mxu0
        %v1572 = vadd.f32 0.0, %v1571
        %v1573 = vpop.f32.mrb[0].mxu0
        %v1574 = vpop.f32.mrb[0].mxu0
        %v1575 = vadd.f32 0.0, %v1574
        %v1576 = vpop.f32.mrb[0].mxu0
        %1577 = vmatprep.mubr.bf16.mxu0 0
        %1578 = vmatmul.mubr.bf16.gmra.mrb[0].mxu0 %v993
        %v1579 = vpop.f32.mrb[0].mxu0
        %v1580 = vadd.f32 0.0, %v1579
        %v1581 = vpop.f32.mrb[0].mxu0
        %v1582 = vpop.f32.mrb[0].mxu0
        %v1583 = vadd.f32 0.0, %v1582
        %v1584 = vpop.f32.mrb[0].mxu0
        %1585 = vmatprep.mubr.bf16.mxu0 0
        %1586 = vmatmul.mubr.bf16.gmra.mrb[0].mxu0 %v994
        %v1587 = vpop.f32.mrb[0].mxu0
        %v1588 = vadd.f32 0.0, %v1587
        %v1589 = vpop.f32.mrb[0].mxu0
        %v1590 = vpop.f32.mrb[0].mxu0
        %v1591 = vadd.f32 0.0, %v1590
        %v1592 = vpop.f32.mrb[0].mxu0
        %1593 = vmatprep.mubr.bf16.mxu0 0
        %1594 = vmatmul.mubr.bf16.gmra.mrb[0].mxu0 %v995
        %v1595 = vpop.f32.mrb[0].mxu0
        %v1596 = vadd.f32 0.0, %v1595
        %v1597 = vpop.f32.mrb[0].mxu0
        %v1598 = vpop.f32.mrb[0].mxu0
        %v1599 = vadd.f32 0.0, %v1598
        %v1600 = vpop.f32.mrb[0].mxu0
        %1601 = vmatprep.mubr.bf16.mxu0 0
        %1602 = vmatmul.mubr.bf16.gmra.mrb[0].mxu0 %v996
        %v1603 = vpop.f32.mrb[0].mxu0
        %v1604 = vadd.f32 0.0, %v1603
        %v1605 = vpop.f32.mrb[0].mxu0
        %v1606 = vpop.f32.mrb[0].mxu0
        %v1607 = vadd.f32 0.0, %v1606
        %v1608 = vpop.f32.mrb[0].mxu0
        %1609 = vmatprep.mubr.bf16.mxu0 0
        %1610 = vmatmul.mubr.bf16.gmra.mrb[0].mxu0 %v997
        %v1611 = vpop.f32.mrb[0].mxu0
        %v1612 = vadd.f32 0.0, %v1611
        %v1613 = vpop.f32.mrb[0].mxu0
        %v1614 = vpop.f32.mrb[0].mxu0
        %v1615 = vadd.f32 0.0, %v1614
        %v1616 = vpop.f32.mrb[0].mxu0
        %1617 = vmatprep.mubr.bf16.mxu0 0
        %1618 = vmatmul.mubr.bf16.gmra.mrb[0].mxu0 %v998
        %v1619 = vpop.f32.mrb[0].mxu0
        %v1620 = vadd.f32 0.0, %v1619
        %v1621 = vpop.f32.mrb[0].mxu0
        %v1622 = vpop.f32.mrb[0].mxu0
        %v1623 = vadd.f32 0.0, %v1622
        %v1624 = vpop.f32.mrb[0].mxu0
        %1625 = vdwg.mxu0
        %v1626 = vld [vmem:[%s5] sm:$0x1]
        %v1628 = vlaneseq
        %v1629 = vshrl.u32 %v1628, 7
        %v1630 = vsub.s32 0, %v1629
        %v1631 = vrot.slane %v1626, %v1630
        %v1633 = vadd.f32 %v1467, %v1631
        %v1634 = vadd.f32 %v1470, %v1631
        %v1635 = vadd.f32 %v1475, %v1631
        %v1636 = vadd.f32 %v1478, %v1631
        %v1637 = vadd.f32 %v1483, %v1631
        %v1638 = vadd.f32 %v1486, %v1631
        %v1639 = vadd.f32 %v1491, %v1631
        %v1640 = vadd.f32 %v1494, %v1631
        %v1641 = vadd.f32 %v1499, %v1631
        %v1642 = vadd.f32 %v1502, %v1631
        %v1643 = vadd.f32 %v1507, %v1631
        %v1644 = vadd.f32 %v1510, %v1631
        %v1645 = vadd.f32 %v1515, %v1631
        %v1646 = vadd.f32 %v1518, %v1631
        %v1647 = vadd.f32 %v1523, %v1631
        %v1648 = vadd.f32 %v1526, %v1631
        %v1649 = vadd.f32 %v1564, %v1631
        %v1650 = vadd.f32 %v1567, %v1631
        %v1651 = vadd.f32 %v1572, %v1631
        %v1652 = vadd.f32 %v1575, %v1631
        %v1653 = vadd.f32 %v1580, %v1631
        %v1654 = vadd.f32 %v1583, %v1631
        %v1655 = vadd.f32 %v1588, %v1631
        %v1656 = vadd.f32 %v1591, %v1631
        %v1657 = vadd.f32 %v1596, %v1631
        %v1658 = vadd.f32 %v1599, %v1631
        %v1659 = vadd.f32 %v1604, %v1631
        %v1660 = vadd.f32 %v1607, %v1631
        %v1661 = vadd.f32 %v1612, %v1631
        %v1662 = vadd.f32 %v1615, %v1631
        %v1663 = vadd.f32 %v1620, %v1631
        %v1664 = vadd.f32 %v1623, %v1631
        %v1665 = vmax.f32 %v1633, 0.0
        %v1666 = vmax.f32 %v1634, 0.0
        %v1667 = vmax.f32 %v1635, 0.0
        %v1668 = vmax.f32 %v1636, 0.0
        %v1669 = vmax.f32 %v1637, 0.0
        %v1670 = vmax.f32 %v1638, 0.0
        %v1671 = vmax.f32 %v1639, 0.0
        %v1672 = vmax.f32 %v1640, 0.0
        %v1673 = vmax.f32 %v1641, 0.0
        %v1674 = vmax.f32 %v1642, 0.0
        %v1675 = vmax.f32 %v1643, 0.0
        %v1676 = vmax.f32 %v1644, 0.0
        %v1677 = vmax.f32 %v1645, 0.0
        %v1678 = vmax.f32 %v1646, 0.0
        %v1679 = vmax.f32 %v1647, 0.0
        %v1680 = vmax.f32 %v1648, 0.0
        %v1681 = vmax.f32 %v1649, 0.0
        %v1682 = vmax.f32 %v1650, 0.0
        %v1683 = vmax.f32 %v1651, 0.0
        %v1684 = vmax.f32 %v1652, 0.0
        %v1685 = vmax.f32 %v1653, 0.0
        %v1686 = vmax.f32 %v1654, 0.0
        %v1687 = vmax.f32 %v1655, 0.0
        %v1688 = vmax.f32 %v1656, 0.0
        %v1689 = vmax.f32 %v1657, 0.0
        %v1690 = vmax.f32 %v1658, 0.0
        %v1691 = vmax.f32 %v1659, 0.0
        %v1692 = vmax.f32 %v1660, 0.0
        %v1693 = vmax.f32 %v1661, 0.0
        %v1694 = vmax.f32 %v1662, 0.0
        %v1695 = vmax.f32 %v1663, 0.0
        %v1696 = vmax.f32 %v1664, 0.0
        %v1697 = vpack.c.bf16 %v1666, %v1665
        %v1698 = vpack.c.bf16 %v1668, %v1667
        %v1699 = vpack.c.bf16 %v1670, %v1669
        %v1700 = vpack.c.bf16 %v1672, %v1671
        %v1701 = vpack.c.bf16 %v1674, %v1673
        %v1702 = vpack.c.bf16 %v1676, %v1675
        %v1703 = vpack.c.bf16 %v1678, %v1677
        %v1704 = vpack.c.bf16 %v1680, %v1679
        %v1705 = vpack.c.bf16 %v1682, %v1681
        %v1706 = vpack.c.bf16 %v1684, %v1683
        %v1707 = vpack.c.bf16 %v1686, %v1685
        %v1708 = vpack.c.bf16 %v1688, %v1687
        %v1709 = vpack.c.bf16 %v1690, %v1689
        %v1710 = vpack.c.bf16 %v1692, %v1691
        %v1711 = vpack.c.bf16 %v1694, %v1693
        %v1712 = vpack.c.bf16 %v1696, %v1695
        %v1713 = vld [vmem:[#allocation10] sm:$0xf]
        %v1714 = vld [vmem:[#allocation10 + $0x4] sm:$0xf]
        %v1715 = vld [vmem:[#allocation10 + $0x8] sm:$0xf]
        %v1716 = vld [vmem:[#allocation10 + $0xc] sm:$0xf]
        %v1717 = vld [vmem:[#allocation10 + $0x10] sm:$0xf]
        %v1718 = vld [vmem:[#allocation10 + $0x14] sm:$0xf]
        %v1719 = vld [vmem:[#allocation10 + $0x18] sm:$0xf]
        %v1720 = vld [vmem:[#allocation10 + $0x1c] sm:$0xf]
        %v1721 = vld [vmem:[#allocation10 + $0x20] sm:$0xf]
        %v1722 = vld [vmem:[#allocation10 + $0x24] sm:$0xf]
        %v1723 = vld [vmem:[#allocation10 + $0x28] sm:$0xf]
        %v1724 = vld [vmem:[#allocation10 + $0x2c] sm:$0xf]
        %v1725 = vld [vmem:[#allocation10 + $0x30] sm:$0xf]
        %v1726 = vld [vmem:[#allocation10 + $0x34] sm:$0xf]
        %v1727 = vld [vmem:[#allocation10 + $0x38] sm:$0xf]
        %v1728 = vld [vmem:[#allocation10 + $0x3c] sm:$0xf]
        %v1745 = vunpack.c.l.b16 %v1713
        %v1746 = vunpack.c.l.b16 %v1714
        %v1747 = vunpack.c.l.b16 %v1715
        %v1748 = vunpack.c.l.b16 %v1716
        %v1749 = vunpack.c.l.b16 %v1717
        %v1750 = vunpack.c.l.b16 %v1718
        %v1751 = vunpack.c.l.b16 %v1719
        %v1752 = vunpack.c.l.b16 %v1720
        %v1753 = vunpack.c.l.b16 %v1721
        %v1754 = vunpack.c.l.b16 %v1722
        %v1755 = vunpack.c.l.b16 %v1723
        %v1756 = vunpack.c.l.b16 %v1724
        %v1757 = vunpack.c.l.b16 %v1725
        %v1758 = vunpack.c.l.b16 %v1726
        %v1759 = vunpack.c.l.b16 %v1727
        %v1760 = vunpack.c.l.b16 %v1728
        %v1761 = vpack.c.b16 %v1746, %v1745
        %v1762 = vpack.c.b16 %v1748, %v1747
        %v1763 = vpack.c.b16 %v1750, %v1749
        %v1764 = vpack.c.b16 %v1752, %v1751
        %v1765 = vpack.c.b16 %v1754, %v1753
        %v1766 = vpack.c.b16 %v1756, %v1755
        %v1767 = vpack.c.b16 %v1758, %v1757
        %v1768 = vpack.c.b16 %v1760, %v1759
        %1777 = vmatprep.subr.bf16.mxu0 0
        %1778 = vmatpush1.bf16.msra.mxu0 %v1761
        %1779 = vmatprep.subr.bf16.mxu0 0
        %1780 = vmatpush1.bf16.msra.mxu0 %v1762
        %1781 = vmatprep.subr.bf16.mxu0 0
        %1782 = vmatpush1.bf16.msra.mxu0 %v1763
        %1783 = vmatprep.subr.bf16.mxu0 0
        %1784 = vmatpush1.bf16.msra.mxu0 %v1764
        %1785 = vmatprep.subr.bf16.mxu0 0
        %1786 = vmatpush1.bf16.msra.mxu0 %v1765
        %1787 = vmatprep.subr.bf16.mxu0 0
        %1788 = vmatpush1.bf16.msra.mxu0 %v1766
        %1789 = vmatprep.subr.bf16.mxu0 0
        %1790 = vmatpush1.bf16.msra.mxu0 %v1767
        %1791 = vmatprep.subr.bf16.mxu0 0
        %1792 = vmatpush1.bf16.msra.mxu0 %v1768
        %1793 = vmatprep.subr.bf16.mxu0 0
        %1794 = vmatpush1.bf16.msra.mxu0 0
        %1795 = vmatprep.subr.bf16.mxu0 0
        %1796 = vmatpush1.bf16.msra.mxu0 0
        %1797 = vmatprep.subr.bf16.mxu0 0
        %1798 = vmatpush1.bf16.msra.mxu0 0
        %1799 = vmatprep.subr.bf16.mxu0 0
        %1800 = vmatpush1.bf16.msra.mxu0 0
        %1801 = vmatprep.subr.bf16.mxu0 0
        %1802 = vmatpush1.bf16.msra.mxu0 0
        %1803 = vmatprep.subr.bf16.mxu0 0
        %1804 = vmatpush1.bf16.msra.mxu0 0
        %1805 = vmatprep.subr.bf16.mxu0 0
        %1806 = vmatpush1.bf16.msra.mxu0 0
        %1807 = vmatprep.subr.bf16.mxu0 0
        %1808 = vmatpush1.bf16.msra.mxu0 0
        %1809 = vmatprep.mubr.bf16.mxu0 0
        %1810 = vmatmul.mubr.bf16.gmra.mrb[0].mxu0 %v1697
        %v1811 = vpop.f32.mrb[0].mxu0
        %v1812 = vadd.f32 0.0, %v1811
        %v1813 = vpop.f32.mrb[0].mxu0
        %v1814 = vpop.f32.mrb[0].mxu0
        %v1815 = vadd.f32 0.0, %v1814
        %v1816 = vpop.f32.mrb[0].mxu0
        %1817 = vmatprep.mubr.bf16.mxu0 0
        %1818 = vmatmul.mubr.bf16.gmra.mrb[0].mxu0 %v1698
        %v1819 = vpop.f32.mrb[0].mxu0
        %v1820 = vadd.f32 0.0, %v1819
        %v1821 = vpop.f32.mrb[0].mxu0
        %v1822 = vpop.f32.mrb[0].mxu0
        %v1823 = vadd.f32 0.0, %v1822
        %v1824 = vpop.f32.mrb[0].mxu0
        %1825 = vmatprep.mubr.bf16.mxu0 0
        %1826 = vmatmul.mubr.bf16.gmra.mrb[0].mxu0 %v1699
        %v1827 = vpop.f32.mrb[0].mxu0
        %v1828 = vadd.f32 0.0, %v1827
        %v1829 = vpop.f32.mrb[0].mxu0
        %v1830 = vpop.f32.mrb[0].mxu0
        %v1831 = vadd.f32 0.0, %v1830
        %v1832 = vpop.f32.mrb[0].mxu0
        %1833 = vmatprep.mubr.bf16.mxu0 0
        %1834 = vmatmul.mubr.bf16.gmra.mrb[0].mxu0 %v1700
        %v1835 = vpop.f32.mrb[0].mxu0
        %v1836 = vadd.f32 0.0, %v1835
        %v1837 = vpop.f32.mrb[0].mxu0
        %v1838 = vpop.f32.mrb[0].mxu0
        %v1839 = vadd.f32 0.0, %v1838
        %v1840 = vpop.f32.mrb[0].mxu0
        %1841 = vmatprep.mubr.bf16.mxu0 0
        %1842 = vmatmul.mubr.bf16.gmra.mrb[0].mxu0 %v1701
        %v1843 = vpop.f32.mrb[0].mxu0
        %v1844 = vadd.f32 0.0, %v1843
        %v1845 = vpop.f32.mrb[0].mxu0
        %v1846 = vpop.f32.mrb[0].mxu0
        %v1847 = vadd.f32 0.0, %v1846
        %v1848 = vpop.f32.mrb[0].mxu0
        %1849 = vmatprep.mubr.bf16.mxu0 0
        %1850 = vmatmul.mubr.bf16.gmra.mrb[0].mxu0 %v1702
        %v1851 = vpop.f32.mrb[0].mxu0
        %v1852 = vadd.f32 0.0, %v1851
        %v1853 = vpop.f32.mrb[0].mxu0
        %v1854 = vpop.f32.mrb[0].mxu0
        %v1855 = vadd.f32 0.0, %v1854
        %v1856 = vpop.f32.mrb[0].mxu0
        %1857 = vmatprep.mubr.bf16.mxu0 0
        %1858 = vmatmul.mubr.bf16.gmra.mrb[0].mxu0 %v1703
        %v1859 = vpop.f32.mrb[0].mxu0
        %v1860 = vadd.f32 0.0, %v1859
        %v1861 = vpop.f32.mrb[0].mxu0
        %v1862 = vpop.f32.mrb[0].mxu0
        %v1863 = vadd.f32 0.0, %v1862
        %v1864 = vpop.f32.mrb[0].mxu0
        %1865 = vmatprep.mubr.bf16.mxu0 0
        %1866 = vmatmul.mubr.bf16.gmra.mrb[0].mxu0 %v1704
        %v1867 = vpop.f32.mrb[0].mxu0
        %v1868 = vadd.f32 0.0, %v1867
        %v1869 = vpop.f32.mrb[0].mxu0
        %v1870 = vpop.f32.mrb[0].mxu0
        %v1871 = vadd.f32 0.0, %v1870
        %v1872 = vpop.f32.mrb[0].mxu0
        %1873 = vmatprep.mubr.bf16.mxu0 0
        %1874 = vmatmul.mubr.bf16.gmra.mrb[0].mxu0 %v1705
        %v1875 = vpop.f32.mrb[0].mxu0
        %v1876 = vadd.f32 0.0, %v1875
        %v1877 = vpop.f32.mrb[0].mxu0
        %v1878 = vpop.f32.mrb[0].mxu0
        %v1879 = vadd.f32 0.0, %v1878
        %v1880 = vpop.f32.mrb[0].mxu0
        %1881 = vmatprep.mubr.bf16.mxu0 0
        %1882 = vmatmul.mubr.bf16.gmra.mrb[0].mxu0 %v1706
        %v1883 = vpop.f32.mrb[0].mxu0
        %v1884 = vadd.f32 0.0, %v1883
        %v1885 = vpop.f32.mrb[0].mxu0
        %v1886 = vpop.f32.mrb[0].mxu0
        %v1887 = vadd.f32 0.0, %v1886
        %v1888 = vpop.f32.mrb[0].mxu0
        %1889 = vmatprep.mubr.bf16.mxu0 0
        %1890 = vmatmul.mubr.bf16.gmra.mrb[0].mxu0 %v1707
        %v1891 = vpop.f32.mrb[0].mxu0
        %v1892 = vadd.f32 0.0, %v1891
        %v1893 = vpop.f32.mrb[0].mxu0
        %v1894 = vpop.f32.mrb[0].mxu0
        %v1895 = vadd.f32 0.0, %v1894
        %v1896 = vpop.f32.mrb[0].mxu0
        %1897 = vmatprep.mubr.bf16.mxu0 0
        %1898 = vmatmul.mubr.bf16.gmra.mrb[0].mxu0 %v1708
        %v1899 = vpop.f32.mrb[0].mxu0
        %v1900 = vadd.f32 0.0, %v1899
        %v1901 = vpop.f32.mrb[0].mxu0
        %v1902 = vpop.f32.mrb[0].mxu0
        %v1903 = vadd.f32 0.0, %v1902
        %v1904 = vpop.f32.mrb[0].mxu0
        %1905 = vmatprep.mubr.bf16.mxu0 0
        %1906 = vmatmul.mubr.bf16.gmra.mrb[0].mxu0 %v1709
        %v1907 = vpop.f32.mrb[0].mxu0
        %v1908 = vadd.f32 0.0, %v1907
        %v1909 = vpop.f32.mrb[0].mxu0
        %v1910 = vpop.f32.mrb[0].mxu0
        %v1911 = vadd.f32 0.0, %v1910
        %v1912 = vpop.f32.mrb[0].mxu0
        %1913 = vmatprep.mubr.bf16.mxu0 0
        %1914 = vmatmul.mubr.bf16.gmra.mrb[0].mxu0 %v1710
        %v1915 = vpop.f32.mrb[0].mxu0
        %v1916 = vadd.f32 0.0, %v1915
        %v1917 = vpop.f32.mrb[0].mxu0
        %v1918 = vpop.f32.mrb[0].mxu0
        %v1919 = vadd.f32 0.0, %v1918
        %v1920 = vpop.f32.mrb[0].mxu0
        %1921 = vmatprep.mubr.bf16.mxu0 0
        %1922 = vmatmul.mubr.bf16.gmra.mrb[0].mxu0 %v1711
        %v1923 = vpop.f32.mrb[0].mxu0
        %v1924 = vadd.f32 0.0, %v1923
        %v1925 = vpop.f32.mrb[0].mxu0
        %v1926 = vpop.f32.mrb[0].mxu0
        %v1927 = vadd.f32 0.0, %v1926
        %v1928 = vpop.f32.mrb[0].mxu0
        %1929 = vmatprep.mubr.bf16.mxu0 0
        %1930 = vmatmul.mubr.bf16.gmra.mrb[0].mxu0 %v1712
        %v1931 = vpop.f32.mrb[0].mxu0
        %v1932 = vadd.f32 0.0, %v1931
        %v1933 = vpop.f32.mrb[0].mxu0
        %v1934 = vpop.f32.mrb[0].mxu0
        %v1935 = vadd.f32 0.0, %v1934
        %v1936 = vpop.f32.mrb[0].mxu0
        %1937 = vdwg.mxu0
        %v1938 = vpack.c.bf16 %v1815, %v1812
        %v1939 = vpack.c.bf16 %v1823, %v1820
        %v1940 = vpack.c.bf16 %v1831, %v1828
        %v1941 = vpack.c.bf16 %v1839, %v1836
        %v1942 = vpack.c.bf16 %v1847, %v1844
        %v1943 = vpack.c.bf16 %v1855, %v1852
        %v1944 = vpack.c.bf16 %v1863, %v1860
        %v1945 = vpack.c.bf16 %v1871, %v1868
        %v1946 = vpack.c.bf16 %v1879, %v1876
        %v1947 = vpack.c.bf16 %v1887, %v1884
        %v1948 = vpack.c.bf16 %v1895, %v1892
        %v1949 = vpack.c.bf16 %v1903, %v1900
        %v1950 = vpack.c.bf16 %v1911, %v1908
        %v1951 = vpack.c.bf16 %v1919, %v1916
        %v1952 = vpack.c.bf16 %v1927, %v1924
        %v1953 = vpack.c.bf16 %v1935, %v1932
        %1954 = vmatprep.subr.bf16.mxu0 0
        %1955 = vmatpush1.bf16.msra.mxu0 %v1938
        %1956 = vmatprep.subr.bf16.mxu0 0
        %1957 = vmatpush1.bf16.msra.mxu0 %v1939
        %1958 = vmatprep.subr.bf16.mxu0 0
        %1959 = vmatpush1.bf16.msra.mxu0 %v1940
        %1960 = vmatprep.subr.bf16.mxu0 0
        %1961 = vmatpush1.bf16.msra.mxu0 %v1941
        %1962 = vmatprep.subr.bf16.mxu0 0
        %1963 = vmatpush1.bf16.msra.mxu0 %v1942
        %1964 = vmatprep.subr.bf16.mxu0 0
        %1965 = vmatpush1.bf16.msra.mxu0 %v1943
        %1966 = vmatprep.subr.bf16.mxu0 0
        %1967 = vmatpush1.bf16.msra.mxu0 %v1944
        %1968 = vmatprep.subr.bf16.mxu0 0
        %1969 = vmatpush1.bf16.msra.mxu0 %v1945
        %1970 = vmatprep.subr.bf16.mxu0 0
        %1971 = vmatpush1.bf16.msra.mxu0 0
        %1972 = vmatprep.subr.bf16.mxu0 0
        %1973 = vmatpush1.bf16.msra.mxu0 0
        %1974 = vmatprep.subr.bf16.mxu0 0
        %1975 = vmatpush1.bf16.msra.mxu0 0
        %1976 = vmatprep.subr.bf16.mxu0 0
        %1977 = vmatpush1.bf16.msra.mxu0 0
        %1978 = vmatprep.subr.bf16.mxu0 0
        %1979 = vmatpush1.bf16.msra.mxu0 0
        %1980 = vmatprep.subr.bf16.mxu0 0
        %1981 = vmatpush1.bf16.msra.mxu0 0
        %1982 = vmatprep.subr.bf16.mxu0 0
        %1983 = vmatpush1.bf16.msra.mxu0 0
        %1984 = vmatprep.subr.bf16.mxu0 0
        %1985 = vmatpush1.bf16.msra.mxu0 0
        %1986 = vmatprep.mubr.bf16.mxu0 0
        %1987 = vmatmul.mubr.bf16.gmra.mrb[0].mxu0 %v846
        %v1988 = vpop.f32.mrb[0].mxu0
        %v1989 = vadd.f32 0.0, %v1988
        %v1990 = vpop.f32.mrb[0].mxu0
        %v1991 = vpop.f32.mrb[0].mxu0
        %v1992 = vadd.f32 0.0, %v1991
        %v1993 = vpop.f32.mrb[0].mxu0
        %1994 = vmatprep.mubr.bf16.mxu0 0
        %1995 = vmatmul.mubr.bf16.gmra.mrb[0].mxu0 %v847
        %v1996 = vpop.f32.mrb[0].mxu0
        %v1997 = vadd.f32 0.0, %v1996
        %v1998 = vpop.f32.mrb[0].mxu0
        %v1999 = vpop.f32.mrb[0].mxu0
        %v2000 = vadd.f32 0.0, %v1999
        %v2001 = vpop.f32.mrb[0].mxu0
        %2002 = vmatprep.mubr.bf16.mxu0 0
        %2003 = vmatmul.mubr.bf16.gmra.mrb[0].mxu0 %v848
        %v2004 = vpop.f32.mrb[0].mxu0
        %v2005 = vadd.f32 0.0, %v2004
        %v2006 = vpop.f32.mrb[0].mxu0
        %v2007 = vpop.f32.mrb[0].mxu0
        %v2008 = vadd.f32 0.0, %v2007
        %v2009 = vpop.f32.mrb[0].mxu0
        %2010 = vmatprep.mubr.bf16.mxu0 0
        %2011 = vmatmul.mubr.bf16.gmra.mrb[0].mxu0 %v849
        %v2012 = vpop.f32.mrb[0].mxu0
        %v2013 = vadd.f32 0.0, %v2012
        %v2014 = vpop.f32.mrb[0].mxu0
        %v2015 = vpop.f32.mrb[0].mxu0
        %v2016 = vadd.f32 0.0, %v2015
        %v2017 = vpop.f32.mrb[0].mxu0
        %2018 = vmatprep.mubr.bf16.mxu0 0
        %2019 = vmatmul.mubr.bf16.gmra.mrb[0].mxu0 %v850
        %v2020 = vpop.f32.mrb[0].mxu0
        %v2021 = vadd.f32 0.0, %v2020
        %v2022 = vpop.f32.mrb[0].mxu0
        %v2023 = vpop.f32.mrb[0].mxu0
        %v2024 = vadd.f32 0.0, %v2023
        %v2025 = vpop.f32.mrb[0].mxu0
        %2026 = vmatprep.mubr.bf16.mxu0 0
        %2027 = vmatmul.mubr.bf16.gmra.mrb[0].mxu0 %v851
        %v2028 = vpop.f32.mrb[0].mxu0
        %v2029 = vadd.f32 0.0, %v2028
        %v2030 = vpop.f32.mrb[0].mxu0
        %v2031 = vpop.f32.mrb[0].mxu0
        %v2032 = vadd.f32 0.0, %v2031
        %v2033 = vpop.f32.mrb[0].mxu0
        %2034 = vmatprep.mubr.bf16.mxu0 0
        %2035 = vmatmul.mubr.bf16.gmra.mrb[0].mxu0 %v852
        %v2036 = vpop.f32.mrb[0].mxu0
        %v2037 = vadd.f32 0.0, %v2036
        %v2038 = vpop.f32.mrb[0].mxu0
        %v2039 = vpop.f32.mrb[0].mxu0
        %v2040 = vadd.f32 0.0, %v2039
        %v2041 = vpop.f32.mrb[0].mxu0
        %2042 = vmatprep.mubr.bf16.mxu0 0
        %2043 = vmatmul.mubr.bf16.gmra.mrb[0].mxu0 %v853
        %v2044 = vpop.f32.mrb[0].mxu0
        %v2045 = vadd.f32 0.0, %v2044
        %v2046 = vpop.f32.mrb[0].mxu0
        %v2047 = vpop.f32.mrb[0].mxu0
        %v2048 = vadd.f32 0.0, %v2047
        %v2049 = vpop.f32.mrb[0].mxu0
        %2050 = vdwg.mxu0
        %2051 = vmatprep.subr.bf16.mxu0 0
        %2052 = vmatpush1.bf16.msra.mxu0 %v1946
        %2053 = vmatprep.subr.bf16.mxu0 0
        %2054 = vmatpush1.bf16.msra.mxu0 %v1947
        %2055 = vmatprep.subr.bf16.mxu0 0
        %2056 = vmatpush1.bf16.msra.mxu0 %v1948
        %2057 = vmatprep.subr.bf16.mxu0 0
        %2058 = vmatpush1.bf16.msra.mxu0 %v1949
        %2059 = vmatprep.subr.bf16.mxu0 0
        %2060 = vmatpush1.bf16.msra.mxu0 %v1950
        %2061 = vmatprep.subr.bf16.mxu0 0
        %2062 = vmatpush1.bf16.msra.mxu0 %v1951
        %2063 = vmatprep.subr.bf16.mxu0 0
        %2064 = vmatpush1.bf16.msra.mxu0 %v1952
        %2065 = vmatprep.subr.bf16.mxu0 0
        %2066 = vmatpush1.bf16.msra.mxu0 %v1953
        %2067 = vmatprep.subr.bf16.mxu0 0
        %2068 = vmatpush1.bf16.msra.mxu0 0
        %2069 = vmatprep.subr.bf16.mxu0 0
        %2070 = vmatpush1.bf16.msra.mxu0 0
        %2071 = vmatprep.subr.bf16.mxu0 0
        %2072 = vmatpush1.bf16.msra.mxu0 0
        %2073 = vmatprep.subr.bf16.mxu0 0
        %2074 = vmatpush1.bf16.msra.mxu0 0
        %2075 = vmatprep.subr.bf16.mxu0 0
        %2076 = vmatpush1.bf16.msra.mxu0 0
        %2077 = vmatprep.subr.bf16.mxu0 0
        %2078 = vmatpush1.bf16.msra.mxu0 0
        %2079 = vmatprep.subr.bf16.mxu0 0
        %2080 = vmatpush1.bf16.msra.mxu0 0
        %2081 = vmatprep.subr.bf16.mxu0 0
        %2082 = vmatpush1.bf16.msra.mxu0 0
        %2083 = vmatprep.mubr.bf16.mxu0 0
        %2084 = vmatmul.mubr.bf16.gmra.mrb[0].mxu0 %v991
        %v2085 = vpop.f32.mrb[0].mxu0
        %v2086 = vadd.f32 0.0, %v2085
        %v2087 = vpop.f32.mrb[0].mxu0
        %v2088 = vpop.f32.mrb[0].mxu0
        %v2089 = vadd.f32 0.0, %v2088
        %v2090 = vpop.f32.mrb[0].mxu0
        %2091 = vmatprep.mubr.bf16.mxu0 0
        %2092 = vmatmul.mubr.bf16.gmra.mrb[0].mxu0 %v992
        %v2093 = vpop.f32.mrb[0].mxu0
        %v2094 = vadd.f32 0.0, %v2093
        %v2095 = vpop.f32.mrb[0].mxu0
        %v2096 = vpop.f32.mrb[0].mxu0
        %v2097 = vadd.f32 0.0, %v2096
        %v2098 = vpop.f32.mrb[0].mxu0
        %2099 = vmatprep.mubr.bf16.mxu0 0
        %2100 = vmatmul.mubr.bf16.gmra.mrb[0].mxu0 %v993
        %v2101 = vpop.f32.mrb[0].mxu0
        %v2102 = vadd.f32 0.0, %v2101
        %v2103 = vpop.f32.mrb[0].mxu0
        %v2104 = vpop.f32.mrb[0].mxu0
        %v2105 = vadd.f32 0.0, %v2104
        %v2106 = vpop.f32.mrb[0].mxu0
        %2107 = vmatprep.mubr.bf16.mxu0 0
        %2108 = vmatmul.mubr.bf16.gmra.mrb[0].mxu0 %v994
        %v2109 = vpop.f32.mrb[0].mxu0
        %v2110 = vadd.f32 0.0, %v2109
        %v2111 = vpop.f32.mrb[0].mxu0
        %v2112 = vpop.f32.mrb[0].mxu0
        %v2113 = vadd.f32 0.0, %v2112
        %v2114 = vpop.f32.mrb[0].mxu0
        %2115 = vmatprep.mubr.bf16.mxu0 0
        %2116 = vmatmul.mubr.bf16.gmra.mrb[0].mxu0 %v995
        %v2117 = vpop.f32.mrb[0].mxu0
        %v2118 = vadd.f32 0.0, %v2117
        %v2119 = vpop.f32.mrb[0].mxu0
        %v2120 = vpop.f32.mrb[0].mxu0
        %v2121 = vadd.f32 0.0, %v2120
        %v2122 = vpop.f32.mrb[0].mxu0
        %2123 = vmatprep.mubr.bf16.mxu0 0
        %2124 = vmatmul.mubr.bf16.gmra.mrb[0].mxu0 %v996
        %v2125 = vpop.f32.mrb[0].mxu0
        %v2126 = vadd.f32 0.0, %v2125
        %v2127 = vpop.f32.mrb[0].mxu0
        %v2128 = vpop.f32.mrb[0].mxu0
        %v2129 = vadd.f32 0.0, %v2128
        %v2130 = vpop.f32.mrb[0].mxu0
        %2131 = vmatprep.mubr.bf16.mxu0 0
        %2132 = vmatmul.mubr.bf16.gmra.mrb[0].mxu0 %v997
        %v2133 = vpop.f32.mrb[0].mxu0
        %v2134 = vadd.f32 0.0, %v2133
        %v2135 = vpop.f32.mrb[0].mxu0
        %v2136 = vpop.f32.mrb[0].mxu0
        %v2137 = vadd.f32 0.0, %v2136
        %v2138 = vpop.f32.mrb[0].mxu0
        %2139 = vmatprep.mubr.bf16.mxu0 0
        %2140 = vmatmul.mubr.bf16.gmra.mrb[0].mxu0 %v998
        %v2141 = vpop.f32.mrb[0].mxu0
        %v2142 = vadd.f32 0.0, %v2141
        %v2143 = vpop.f32.mrb[0].mxu0
        %v2144 = vpop.f32.mrb[0].mxu0
        %v2145 = vadd.f32 0.0, %v2144
        %v2146 = vpop.f32.mrb[0].mxu0
        %2147 = vdwg.mxu0
        %v2148 = vld [vmem:[%s7] sm:$0x1]
        %v2150 = vlaneseq
        %v2151 = vshrl.u32 %v2150, 7
        %v2152 = vsub.s32 0, %v2151
        %v2153 = vrot.slane %v2148, %v2152
        %v2155 = vadd.f32 %v1989, %v2153
        %v2156 = vadd.f32 %v1992, %v2153
        %v2157 = vadd.f32 %v1997, %v2153
        %v2158 = vadd.f32 %v2000, %v2153
        %v2159 = vadd.f32 %v2005, %v2153
        %v2160 = vadd.f32 %v2008, %v2153
        %v2161 = vadd.f32 %v2013, %v2153
        %v2162 = vadd.f32 %v2016, %v2153
        %v2163 = vadd.f32 %v2021, %v2153
        %v2164 = vadd.f32 %v2024, %v2153
        %v2165 = vadd.f32 %v2029, %v2153
        %v2166 = vadd.f32 %v2032, %v2153
        %v2167 = vadd.f32 %v2037, %v2153
        %v2168 = vadd.f32 %v2040, %v2153
        %v2169 = vadd.f32 %v2045, %v2153
        %v2170 = vadd.f32 %v2048, %v2153
        %v2171 = vadd.f32 %v2086, %v2153
        %v2172 = vadd.f32 %v2089, %v2153
        %v2173 = vadd.f32 %v2094, %v2153
        %v2174 = vadd.f32 %v2097, %v2153
        %v2175 = vadd.f32 %v2102, %v2153
        %v2176 = vadd.f32 %v2105, %v2153
        %v2177 = vadd.f32 %v2110, %v2153
        %v2178 = vadd.f32 %v2113, %v2153
        %v2179 = vadd.f32 %v2118, %v2153
        %v2180 = vadd.f32 %v2121, %v2153
        %v2181 = vadd.f32 %v2126, %v2153
        %v2182 = vadd.f32 %v2129, %v2153
        %v2183 = vadd.f32 %v2134, %v2153
        %v2184 = vadd.f32 %v2137, %v2153
        %v2185 = vadd.f32 %v2142, %v2153
        %v2186 = vadd.f32 %v2145, %v2153
        %v2187 = vpack.c.bf16 %v2156, %v2155
        %v2188 = vpack.c.bf16 %v2158, %v2157
        %v2189 = vpack.c.bf16 %v2160, %v2159
        %v2190 = vpack.c.bf16 %v2162, %v2161
        %v2191 = vpack.c.bf16 %v2164, %v2163
        %v2192 = vpack.c.bf16 %v2166, %v2165
        %v2193 = vpack.c.bf16 %v2168, %v2167
        %v2194 = vpack.c.bf16 %v2170, %v2169
        %v2195 = vpack.c.bf16 %v2172, %v2171
        %v2196 = vpack.c.bf16 %v2174, %v2173
        %v2197 = vpack.c.bf16 %v2176, %v2175
        %v2198 = vpack.c.bf16 %v2178, %v2177
        %v2199 = vpack.c.bf16 %v2180, %v2179
        %v2200 = vpack.c.bf16 %v2182, %v2181
        %v2201 = vpack.c.bf16 %v2184, %v2183
        %v2202 = vpack.c.bf16 %v2186, %v2185
        %v2219 = vunpack.c.l.b16 %v2187
        %v2220 = vunpack.c.h.b16 %v2187
        %v2221 = vunpack.c.l.b16 %v2188
        %v2222 = vunpack.c.h.b16 %v2188
        %v2223 = vunpack.c.l.b16 %v2189
        %v2224 = vunpack.c.h.b16 %v2189
        %v2225 = vunpack.c.l.b16 %v2190
        %v2226 = vunpack.c.h.b16 %v2190
        %v2227 = vunpack.c.l.b16 %v2191
        %v2228 = vunpack.c.h.b16 %v2191
        %v2229 = vunpack.c.l.b16 %v2192
        %v2230 = vunpack.c.h.b16 %v2192
        %v2231 = vunpack.c.l.b16 %v2193
        %v2232 = vunpack.c.h.b16 %v2193
        %v2233 = vunpack.c.l.b16 %v2194
        %v2234 = vunpack.c.h.b16 %v2194
        %v2235 = vunpack.c.l.b16 %v2195
        %v2236 = vunpack.c.h.b16 %v2195
        %v2237 = vunpack.c.l.b16 %v2196
        %v2238 = vunpack.c.h.b16 %v2196
        %v2239 = vunpack.c.l.b16 %v2197
        %v2240 = vunpack.c.h.b16 %v2197
        %v2241 = vunpack.c.l.b16 %v2198
        %v2242 = vunpack.c.h.b16 %v2198
        %v2243 = vunpack.c.l.b16 %v2199
        %v2244 = vunpack.c.h.b16 %v2199
        %v2245 = vunpack.c.l.b16 %v2200
        %v2246 = vunpack.c.h.b16 %v2200
        %v2247 = vunpack.c.l.b16 %v2201
        %v2248 = vunpack.c.h.b16 %v2201
        %v2249 = vunpack.c.l.b16 %v2202
        %v2250 = vunpack.c.h.b16 %v2202
        %v2251 = vpack.c.b16 %v2219, %v2219
        %v2252 = vpack.c.b16 %v2220, %v2220
        %v2253 = vpack.c.b16 %v2221, %v2221
        %v2254 = vpack.c.b16 %v2222, %v2222
        %v2255 = vpack.c.b16 %v2223, %v2223
        %v2256 = vpack.c.b16 %v2224, %v2224
        %v2257 = vpack.c.b16 %v2225, %v2225
        %v2258 = vpack.c.b16 %v2226, %v2226
        %v2259 = vpack.c.b16 %v2227, %v2227
        %v2260 = vpack.c.b16 %v2228, %v2228
        %v2261 = vpack.c.b16 %v2229, %v2229
        %v2262 = vpack.c.b16 %v2230, %v2230
        %v2263 = vpack.c.b16 %v2231, %v2231
        %v2264 = vpack.c.b16 %v2232, %v2232
        %v2265 = vpack.c.b16 %v2233, %v2233
        %v2266 = vpack.c.b16 %v2234, %v2234
        %v2267 = vpack.c.b16 %v2235, %v2235
        %v2268 = vpack.c.b16 %v2236, %v2236
        %v2269 = vpack.c.b16 %v2237, %v2237
        %v2270 = vpack.c.b16 %v2238, %v2238
        %v2271 = vpack.c.b16 %v2239, %v2239
        %v2272 = vpack.c.b16 %v2240, %v2240
        %v2273 = vpack.c.b16 %v2241, %v2241
        %v2274 = vpack.c.b16 %v2242, %v2242
        %v2275 = vpack.c.b16 %v2243, %v2243
        %v2276 = vpack.c.b16 %v2244, %v2244
        %v2277 = vpack.c.b16 %v2245, %v2245
        %v2278 = vpack.c.b16 %v2246, %v2246
        %v2279 = vpack.c.b16 %v2247, %v2247
        %v2280 = vpack.c.b16 %v2248, %v2248
        %v2281 = vpack.c.b16 %v2249, %v2249
        %v2282 = vpack.c.b16 %v2250, %v2250
        %2315 = vst [vmem:[%s408] sm:$0xf] %v2251
        %2316 = vst [vmem:[%s408 + $0x4] sm:$0xf] %v2252
        %2317 = vst [vmem:[%s408 + $0x8] sm:$0xf] %v2253
        %2318 = vst [vmem:[%s408 + $0xc] sm:$0xf] %v2254
        %2319 = vst [vmem:[%s408 + $0x10] sm:$0xf] %v2255
        %2320 = vst [vmem:[%s408 + $0x14] sm:$0xf] %v2256
        %2321 = vst [vmem:[%s408 + $0x18] sm:$0xf] %v2257
        %2322 = vst [vmem:[%s408 + $0x1c] sm:$0xf] %v2258
        %2323 = vst [vmem:[%s408 + $0x20] sm:$0xf] %v2259
        %2324 = vst [vmem:[%s408 + $0x24] sm:$0xf] %v2260
        %2325 = vst [vmem:[%s408 + $0x28] sm:$0xf] %v2261
        %2326 = vst [vmem:[%s408 + $0x2c] sm:$0xf] %v2262
        %2327 = vst [vmem:[%s408 + $0x30] sm:$0xf] %v2263
        %2328 = vst [vmem:[%s408 + $0x34] sm:$0xf] %v2264
        %2329 = vst [vmem:[%s408 + $0x38] sm:$0xf] %v2265
        %2330 = vst [vmem:[%s408 + $0x3c] sm:$0xf] %v2266
        %2331 = vst [vmem:[%s408 + $0x40] sm:$0xf] %v2267
        %2332 = vst [vmem:[%s408 + $0x44] sm:$0xf] %v2268
        %2333 = vst [vmem:[%s408 + $0x48] sm:$0xf] %v2269
        %2334 = vst [vmem:[%s408 + $0x4c] sm:$0xf] %v2270
        %2335 = vst [vmem:[%s408 + $0x50] sm:$0xf] %v2271
        %2336 = vst [vmem:[%s408 + $0x54] sm:$0xf] %v2272
        %2337 = vst [vmem:[%s408 + $0x58] sm:$0xf] %v2273
        %2338 = vst [vmem:[%s408 + $0x5c] sm:$0xf] %v2274
        %2339 = vst [vmem:[%s408 + $0x60] sm:$0xf] %v2275
        %2340 = vst [vmem:[%s408 + $0x64] sm:$0xf] %v2276
        %2341 = vst [vmem:[%s408 + $0x68] sm:$0xf] %v2277
        %2342 = vst [vmem:[%s408 + $0x6c] sm:$0xf] %v2278
        %2343 = vst [vmem:[%s408 + $0x70] sm:$0xf] %v2279
        %2344 = vst [vmem:[%s408 + $0x74] sm:$0xf] %v2280
        %2345 = vst [vmem:[%s408 + $0x78] sm:$0xf] %v2281
        %2346 = vst [vmem:[%s408 + $0x7c] sm:$0xf] %v2282
        %s2347 = sand.u32 %s215, 1
        %s2348 = scalar_lea.sflag [#allocation4], %s2347
        %s2349 = sand.u32 %s215, 1
        %s2350 = smul.addr %s2349, 128
        %s2351 = scalar_lea.vmem [#allocation11], %s2350
        // Predicated region
        $region73: #{tpu_custom_call.1} parent=51 // pred_check
          %p2352 = pneg %p225
        $region74: #{tpu_custom_call.1} parent=51 // pred_check_branch
          %2354 = sbr.rel (%p2352) target = $region76
        $region75: #{tpu_custom_call.1} parent=51 // pred_region
          %s2355 = smul.u32 2, %s29
          %s2357 = ssub.s32 2048, 2048
          %2358 = vsyncadd %s2348, %s2357
          %s2359 = smul.addr %s2355, 16
          %s2360 = smul.addr %s2359, 64
          %s2361 = scalar_lea.hbm %s8, %s2360
          %s2362 = sshll.u32 %s2351, 4
          %s2363 = int_to_ptr.vmem [resolvable:$true] %s2362
          %2368 = dma.vmem_to_hbm [thread:$0]  %s2363, 2048, %s2361, %s2348, 64, 64, 4
        $region76: #{tpu_custom_call.1} parent=51 // pred_fallthru
          _
      $region52: #{tpu_custom_call.1} parent=5 // pred_fallthru
        _
      %p2369 = scmp.le.s32.totalorder 2, %s24
      // Predicated region
      $region77: #{tpu_custom_call.1} parent=5 // pred_check
        %p2370 = pneg %p2369
      $region78: #{tpu_custom_call.1} parent=5 // pred_check_branch
        %2372 = sbr.rel (%p2370) target = $region80
      $region79: #{tpu_custom_call.1} parent=5 // pred_region
        %s2373 = ssub.s32 %s24, 2
        // Predicated region
        $region81: #{tpu_custom_call.1} parent=79 // pred_check
          %p2374 = pneg %p231
        $region82: #{tpu_custom_call.1} parent=79 // pred_check_branch
          %2376 = sbr.rel (%p2374) target = $region84
        $region83: #{tpu_custom_call.1} parent=79 // pred_region
          %s2377 = sand.u32 %s216, 1
          %s2378 = scalar_lea.sflag [#allocation4], %s2377
          %s2379 = sand.u32 %s216, 1
          %s2380 = smul.addr %s2379, 128
          %s2381 = scalar_lea.vmem [#allocation11], %s2380
          %2382 = dma.done %s2378, 2048
        $region84: #{tpu_custom_call.1} parent=79 // pred_fallthru
          _
      $region80: #{tpu_custom_call.1} parent=5 // pred_fallthru
        _
    $region6: #{tpu_custom_call.1} parent=1 // loop_footer
      %s28 = sadd.s32 1, %s24
    $region7: #{tpu_custom_call.1} parent=1 // loop_footer_branch
      %23 = sbr.rel target = $region3
    $region8: #{tpu_custom_call.1} parent=1 // loop_exit
      _
    %2383 = vsyncpa [#allocation3], 1
    %s2384 = scalar_lea.sflag [#allocation3], 1
    %2385 = vsyncpa %s2384, 1
    %2386 = vsyncpa [#allocation6], 1
    %s2387 = scalar_lea.sflag [#allocation6], 1
    %2388 = vsyncpa %s2387, 1
    %2389 = vsyncpa [#allocation9], 1
    %2390 = vsyncpa [#allocation4], 1
    %s2391 = scalar_lea.sflag [#allocation4], 1
    %2392 = vsyncpa %s2391, 1

</llo_original>
